<compile_context>
chip_gen: v7x
topology: tpu7x:2x2x1
jax: 0.10.0
libtpu: 0.0.40
codegen_flags: <defaults>
</compile_context>

<pallas_src>
import functools

import numpy as np
import jax
import jax.numpy as jnp
from jax.experimental import pallas as pl
from jax.experimental.pallas import tpu as pltpu


def cbam_kernel(x_ref, w1t_ref, w2t_ref, cmask_ref, wsp_ref, o_ref, pad_ref,
                *, W, HW, HWp, K, BB):
    """One grid step = BB batch elements of CBAM (fully vectorized over BB).

    x_ref    : (BB, C, HWp)          VMEM  input  (lane-dense, zero padded)
    w1t_ref  : (C, Cr)               VMEM  transposed weight of 1x1 conv #1
    w2t_ref  : (Cr, C)               VMEM  transposed weight of 1x1 conv #2
    cmask_ref: (K, HWp)              VMEM  column-validity masks (flat conv)
    wsp_ref  : (2*K*K,)              SMEM  flattened 7x7 spatial-conv weight
    o_ref    : (BB, C, HWp)          VMEM  output (lane-dense)
    pad_ref  : (2*BB, HWp + 2*PAD)   VMEM  zero-haloed flat [avg; max] maps
    """
    P = K // 2
    PAD = P * (W + 1)          # halo wide enough for the largest flat shift
    KK = K * K
    BW = HWp + 2 * P           # width of one kh-band

    # Hoist the tiny spatial-conv weights (SMEM scalars) off the FMA path.
    wts = [wsp_ref[i] for i in range(2 * KK)]

    x = x_ref[...]                                            # (BB, C, HWp)

    # ---------------- channel attention: batched tiny MLP on the MXU --------
    gap = jnp.sum(x, axis=-1) * (1.0 / HW)                    # (BB, C); pad lanes are 0
    hidden = jnp.maximum(
        jnp.dot(gap, w1t_ref[...], preferred_element_type=jnp.float32), 0.0)  # (BB, Cr)
    att = jax.nn.sigmoid(
        jnp.dot(hidden, w2t_ref[...], preferred_element_type=jnp.float32))    # (BB, C)

    # Stage ca in o_ref immediately to bound its live range (no spills across
    # the spatial-attention section at large C).
    o_ref[...] = x * att[:, :, None]                          # (BB, C, HWp)

    # ---------------- spatial attention maps (from the staged ca) -----------
    ca = o_ref[...]
    avg_map = jnp.mean(ca, axis=1)                            # (BB, HWp)
    max_map = jnp.max(ca, axis=1)                             # (BB, HWp)

    # Zero only the halo strips with bulk 2-D stores; interior is overwritten.
    zhalo = jnp.zeros((2 * BB, PAD), jnp.float32)
    pad_ref[:, 0:PAD] = zhalo
    pad_ref[:, PAD + HWp:PAD + HWp + PAD] = zhalo
    pad_ref[0:BB, PAD:PAD + HWp] = avg_map                    # avg maps, rows [0:BB]
    pad_ref[BB:2 * BB, PAD:PAD + HWp] = max_map               # max maps, rows [BB:2BB]

    # 7x7 conv (2 in-ch -> 1 out-ch) in the flat layout, batched over BB:
    #   out[p] += w[c,kh,kw] * map_c[p + (kh-P)*W + (kw-P)]
    # One (BB, HWp+2P) band load per (channel, kh); kw shifts are lane slices
    # of the in-register band; out-of-row leakage removed by host-precomputed
    # column masks; 4 independent accumulators for VPU ILP.
    accs = [jnp.zeros((BB, HWp), jnp.float32) for _ in range(4)]
    t = 0
    for kh in range(K):
        start = PAD + (kh - P) * W - P
        band_a = pad_ref[0:BB, start:start + BW]              # (BB, HWp+2P)
        band_m = pad_ref[BB:2 * BB, start:start + BW]
        for kw in range(K):
            contrib = (wts[kh * K + kw] * band_a[:, kw:kw + HWp]
                       + wts[KK + kh * K + kw] * band_m[:, kw:kw + HWp])
            if kw != P:                  # dw == 0 never crosses a row edge
                contrib = contrib * cmask_ref[kw:kw + 1, :]
            accs[t % 4] = accs[t % 4] + contrib
            t += 1
    sa = jax.nn.sigmoid((accs[0] + accs[1]) + (accs[2] + accs[3]))   # (BB, HWp)

    o_ref[...] = o_ref[...] * sa[:, None, :]                  # lane-dense store


def cbam_pallas(x, w1, w2, w_spatial, *, batch_block=None):
    """x: (B, C, H, W) f32; w1: (Cr, C); w2: (C, Cr); w_spatial: (2, K, K)."""
    B, C, H, W = x.shape
    Cr = w1.shape[0]
    K = w_spatial.shape[-1]
    P = K // 2
    HW = H * W
    HWp = ((HW + 127) // 128) * 128            # lane-dense padded spatial size
    PAD = P * (W + 1)
    W2 = HWp + 2 * PAD

    def block_bytes(bb):
        io = 2 * 2 * bb * C * HWp * 4          # double-buffered in + out blocks
        scratch = 2 * bb * W2 * 4              # haloed avg/max scratch slab
        fixed = (K * HWp + 2 * C * Cr + 2 * K * K) * 4
        return io + scratch + fixed

    if batch_block is None:
        budget = 20 * 1024 * 1024              # conservative: fits v7x 64 MiB VMEM
        divisors = [d for d in range(1, B + 1) if B % d == 0]
        feas = [d for d in divisors if block_bytes(d) <= budget] or [1]
        # Keep >= 2 grid steps (v7x megacore), prefer >= 4 for pipelining.
        desired_steps = 4 if B >= 4 else min(B, 2)
        cap = max(1, B // max(desired_steps, 1))
        capped = [d for d in feas if d <= cap]
        bb = max(capped) if capped else min(feas)
    else:
        bb = batch_block
        assert B % bb == 0

    x_flat = x.reshape(B, C, HW).astype(jnp.float32)          # lane-dense view
    if HWp != HW:
        x_flat = jnp.pad(x_flat, ((0, 0), (0, 0), (0, HWp - HW)))
    w1t = jnp.transpose(w1).astype(jnp.float32)               # (C, Cr)
    w2t = jnp.transpose(w2).astype(jnp.float32)               # (Cr, C)
    wsp_flat = w_spatial.reshape(-1).astype(jnp.float32)      # (2*K*K,) -> SMEM

    # Column-validity masks for the flat-layout conv (host precomputed).
    col = np.arange(HWp) % W
    cmask = np.stack(
        [((col + (kw - P) >= 0) & (col + (kw - P) < W)).astype(np.float32)
         for kw in range(K)], axis=0)                         # (K, HWp)
    cmask = jnp.asarray(cmask)

    kernel = functools.partial(cbam_kernel, W=W, HW=HW, HWp=HWp, K=K, BB=bb)
    vmem_limit = int(min(max(block_bytes(bb) + (4 << 20), 16 << 20), 64 << 20))

    out_flat = pl.pallas_call(
        kernel,
        out_shape=jax.ShapeDtypeStruct((B, C, HWp), jnp.float32),
        grid_spec=pltpu.PrefetchScalarGridSpec(
            num_scalar_prefetch=0,
            grid=(B // bb,),
            in_specs=[
                pl.BlockSpec((bb, C, HWp), lambda b: (b, 0, 0)),
                pl.BlockSpec((C, Cr), lambda b: (0, 0)),
                pl.BlockSpec((Cr, C), lambda b: (0, 0)),
                pl.BlockSpec((K, HWp), lambda b: (0, 0)),
                pl.BlockSpec(memory_space=pltpu.MemorySpace.SMEM),
            ],
            out_specs=pl.BlockSpec((bb, C, HWp), lambda b: (b, 0, 0)),
            scratch_shapes=[pltpu.VMEM((2 * bb, W2), jnp.float32)],
        ),
        compiler_params=pltpu.CompilerParams(
            dimension_semantics=("parallel",),
            vmem_limit_bytes=vmem_limit),
    )(x_flat, w1t, w2t, cmask, wsp_flat)

    return out_flat[:, :, :HW].reshape(B, C, H, W)


def cbam_reference(x, w1, w2, w_spatial):
    """Plain-JAX reference reproducing the PyTorch forward exactly."""
    gap = jnp.mean(x, axis=(2, 3))                               # (B, C)
    hidden = jax.nn.relu(gap @ w1.T)                             # (B, Cr)
    att = jax.nn.sigmoid(hidden @ w2.T)                          # (B, C)
    ca = att[:, :, None, None] * x                               # (B, C, H, W)
    avg_out = jnp.mean(ca, axis=1, keepdims=True)
    max_out = jnp.max(ca, axis=1, keepdims=True)
    sa_in = jnp.concatenate([avg_out, max_out], axis=1)          # (B, 2, H, W)
    K = w_spatial.shape[-1]
    conv = jax.lax.conv_general_dilated(
        sa_in, w_spatial.reshape(1, 2, K, K),
        window_strides=(1, 1), padding=((K // 2, K // 2), (K // 2, K // 2)),
        dimension_numbers=("NCHW", "OIHW", "NCHW"))
    sa = jax.nn.sigmoid(conv)                                    # (B, 1, H, W)
    return sa * ca


if __name__ == "__main__":
    B, C, H, W = 2, 32, 16, 16
    reduction = 16
    Cr = C // reduction
    K = 7

    key = jax.random.PRNGKey(0)
    kx, k1, k2, k3 = jax.random.split(key, 4)
    x = jax.random.normal(kx, (B, C, H, W), dtype=jnp.float32)
    w1 = 0.1 * jax.random.normal(k1, (Cr, C), dtype=jnp.float32)       # 1x1 C->Cr
    w2 = 0.1 * jax.random.normal(k2, (C, Cr), dtype=jnp.float32)       # 1x1 Cr->C
    w_spatial = 0.1 * jax.random.normal(k3, (2, K, K), dtype=jnp.float32)  # 7x7, 2->1

    out = jax.block_until_ready(cbam_pallas(x, w1, w2, w_spatial))
    ref = jax.block_until_ready(cbam_reference(x, w1, w2, w_spatial))

    assert out.shape == (B, C, H, W)
    err = jnp.max(jnp.abs(out - ref))
    assert jnp.allclose(out, ref, rtol=1e-4, atol=1e-4), f"max abs err = {err}"
    print("KERNEL_OK")
</pallas_src>

<mosaic_0001>
module attributes {stable_mosaic.version = 11 : i64} {
  func.func @cbam_kernel(%arg0: i32, %arg1: memref<1x32x256xf32, #tpu.memory_space<vmem>>, %arg2: memref<32x2xf32, #tpu.memory_space<vmem>>, %arg3: memref<2x32xf32, #tpu.memory_space<vmem>>, %arg4: memref<7x256xf32, #tpu.memory_space<vmem>>, %arg5: memref<98xf32, #tpu.memory_space<smem>>, %arg6: memref<1x32x256xf32, #tpu.memory_space<vmem>>, %arg7: memref<2x358xf32, #tpu.memory_space<vmem>>) attributes {dimension_semantics = [#tpu.dimension_semantics<parallel>], iteration_bounds = array<i64: 2>, scalar_prefetch = 0 : i64, scratch_operands = 1 : i64, tpu.core_type = #tpu.core_type<tc>, window_params = [{transform_indices = @transform_0, window_bounds = array<i64: 1, 32, 256>}, {pipeline_mode = #tpu.pipeline_mode<synchronous>, transform_indices = @transform_1, window_bounds = array<i64: 32, 2>}, {pipeline_mode = #tpu.pipeline_mode<synchronous>, transform_indices = @transform_2, window_bounds = array<i64: 2, 32>}, {pipeline_mode = #tpu.pipeline_mode<synchronous>, transform_indices = @transform_3, window_bounds = array<i64: 7, 256>}, {transform_indices = @transform_4, window_bounds = array<i64: 98>}, {transform_indices = @transform_5, window_bounds = array<i64: 1, 32, 256>}]} {
    %c0 = arith.constant 0 : index
    %0 = memref.load %arg5[%c0] : memref<98xf32, #tpu.memory_space<smem>>
    %c1 = arith.constant 1 : index
    %1 = memref.load %arg5[%c1] : memref<98xf32, #tpu.memory_space<smem>>
    %c2 = arith.constant 2 : index
    %2 = memref.load %arg5[%c2] : memref<98xf32, #tpu.memory_space<smem>>
    %c3 = arith.constant 3 : index
    %3 = memref.load %arg5[%c3] : memref<98xf32, #tpu.memory_space<smem>>
    %c4 = arith.constant 4 : index
    %4 = memref.load %arg5[%c4] : memref<98xf32, #tpu.memory_space<smem>>
    %c5 = arith.constant 5 : index
    %5 = memref.load %arg5[%c5] : memref<98xf32, #tpu.memory_space<smem>>
    %c6 = arith.constant 6 : index
    %6 = memref.load %arg5[%c6] : memref<98xf32, #tpu.memory_space<smem>>
    %c7 = arith.constant 7 : index
    %7 = memref.load %arg5[%c7] : memref<98xf32, #tpu.memory_space<smem>>
    %c8 = arith.constant 8 : index
    %8 = memref.load %arg5[%c8] : memref<98xf32, #tpu.memory_space<smem>>
    %c9 = arith.constant 9 : index
    %9 = memref.load %arg5[%c9] : memref<98xf32, #tpu.memory_space<smem>>
    %c10 = arith.constant 10 : index
    %10 = memref.load %arg5[%c10] : memref<98xf32, #tpu.memory_space<smem>>
    %c11 = arith.constant 11 : index
    %11 = memref.load %arg5[%c11] : memref<98xf32, #tpu.memory_space<smem>>
    %c12 = arith.constant 12 : index
    %12 = memref.load %arg5[%c12] : memref<98xf32, #tpu.memory_space<smem>>
    %c13 = arith.constant 13 : index
    %13 = memref.load %arg5[%c13] : memref<98xf32, #tpu.memory_space<smem>>
    %c14 = arith.constant 14 : index
    %14 = memref.load %arg5[%c14] : memref<98xf32, #tpu.memory_space<smem>>
    %c15 = arith.constant 15 : index
    %15 = memref.load %arg5[%c15] : memref<98xf32, #tpu.memory_space<smem>>
    %c16 = arith.constant 16 : index
    %16 = memref.load %arg5[%c16] : memref<98xf32, #tpu.memory_space<smem>>
    %c17 = arith.constant 17 : index
    %17 = memref.load %arg5[%c17] : memref<98xf32, #tpu.memory_space<smem>>
    %c18 = arith.constant 18 : index
    %18 = memref.load %arg5[%c18] : memref<98xf32, #tpu.memory_space<smem>>
    %c19 = arith.constant 19 : index
    %19 = memref.load %arg5[%c19] : memref<98xf32, #tpu.memory_space<smem>>
    %c20 = arith.constant 20 : index
    %20 = memref.load %arg5[%c20] : memref<98xf32, #tpu.memory_space<smem>>
    %c21 = arith.constant 21 : index
    %21 = memref.load %arg5[%c21] : memref<98xf32, #tpu.memory_space<smem>>
    %c22 = arith.constant 22 : index
    %22 = memref.load %arg5[%c22] : memref<98xf32, #tpu.memory_space<smem>>
    %c23 = arith.constant 23 : index
    %23 = memref.load %arg5[%c23] : memref<98xf32, #tpu.memory_space<smem>>
    %c24 = arith.constant 24 : index
    %24 = memref.load %arg5[%c24] : memref<98xf32, #tpu.memory_space<smem>>
    %c25 = arith.constant 25 : index
    %25 = memref.load %arg5[%c25] : memref<98xf32, #tpu.memory_space<smem>>
    %c26 = arith.constant 26 : index
    %26 = memref.load %arg5[%c26] : memref<98xf32, #tpu.memory_space<smem>>
    %c27 = arith.constant 27 : index
    %27 = memref.load %arg5[%c27] : memref<98xf32, #tpu.memory_space<smem>>
    %c28 = arith.constant 28 : index
    %28 = memref.load %arg5[%c28] : memref<98xf32, #tpu.memory_space<smem>>
    %c29 = arith.constant 29 : index
    %29 = memref.load %arg5[%c29] : memref<98xf32, #tpu.memory_space<smem>>
    %c30 = arith.constant 30 : index
    %30 = memref.load %arg5[%c30] : memref<98xf32, #tpu.memory_space<smem>>
    %c31 = arith.constant 31 : index
    %31 = memref.load %arg5[%c31] : memref<98xf32, #tpu.memory_space<smem>>
    %c32 = arith.constant 32 : index
    %32 = memref.load %arg5[%c32] : memref<98xf32, #tpu.memory_space<smem>>
    %c33 = arith.constant 33 : index
    %33 = memref.load %arg5[%c33] : memref<98xf32, #tpu.memory_space<smem>>
    %c34 = arith.constant 34 : index
    %34 = memref.load %arg5[%c34] : memref<98xf32, #tpu.memory_space<smem>>
    %c35 = arith.constant 35 : index
    %35 = memref.load %arg5[%c35] : memref<98xf32, #tpu.memory_space<smem>>
    %c36 = arith.constant 36 : index
    %36 = memref.load %arg5[%c36] : memref<98xf32, #tpu.memory_space<smem>>
    %c37 = arith.constant 37 : index
    %37 = memref.load %arg5[%c37] : memref<98xf32, #tpu.memory_space<smem>>
    %c38 = arith.constant 38 : index
    %38 = memref.load %arg5[%c38] : memref<98xf32, #tpu.memory_space<smem>>
    %c39 = arith.constant 39 : index
    %39 = memref.load %arg5[%c39] : memref<98xf32, #tpu.memory_space<smem>>
    %c40 = arith.constant 40 : index
    %40 = memref.load %arg5[%c40] : memref<98xf32, #tpu.memory_space<smem>>
    %c41 = arith.constant 41 : index
    %41 = memref.load %arg5[%c41] : memref<98xf32, #tpu.memory_space<smem>>
    %c42 = arith.constant 42 : index
    %42 = memref.load %arg5[%c42] : memref<98xf32, #tpu.memory_space<smem>>
    %c43 = arith.constant 43 : index
    %43 = memref.load %arg5[%c43] : memref<98xf32, #tpu.memory_space<smem>>
    %c44 = arith.constant 44 : index
    %44 = memref.load %arg5[%c44] : memref<98xf32, #tpu.memory_space<smem>>
    %c45 = arith.constant 45 : index
    %45 = memref.load %arg5[%c45] : memref<98xf32, #tpu.memory_space<smem>>
    %c46 = arith.constant 46 : index
    %46 = memref.load %arg5[%c46] : memref<98xf32, #tpu.memory_space<smem>>
    %c47 = arith.constant 47 : index
    %47 = memref.load %arg5[%c47] : memref<98xf32, #tpu.memory_space<smem>>
    %c48 = arith.constant 48 : index
    %48 = memref.load %arg5[%c48] : memref<98xf32, #tpu.memory_space<smem>>
    %c49 = arith.constant 49 : index
    %49 = memref.load %arg5[%c49] : memref<98xf32, #tpu.memory_space<smem>>
    %c50 = arith.constant 50 : index
    %50 = memref.load %arg5[%c50] : memref<98xf32, #tpu.memory_space<smem>>
    %c51 = arith.constant 51 : index
    %51 = memref.load %arg5[%c51] : memref<98xf32, #tpu.memory_space<smem>>
    %c52 = arith.constant 52 : index
    %52 = memref.load %arg5[%c52] : memref<98xf32, #tpu.memory_space<smem>>
    %c53 = arith.constant 53 : index
    %53 = memref.load %arg5[%c53] : memref<98xf32, #tpu.memory_space<smem>>
    %c54 = arith.constant 54 : index
    %54 = memref.load %arg5[%c54] : memref<98xf32, #tpu.memory_space<smem>>
    %c55 = arith.constant 55 : index
    %55 = memref.load %arg5[%c55] : memref<98xf32, #tpu.memory_space<smem>>
    %c56 = arith.constant 56 : index
    %56 = memref.load %arg5[%c56] : memref<98xf32, #tpu.memory_space<smem>>
    %c57 = arith.constant 57 : index
    %57 = memref.load %arg5[%c57] : memref<98xf32, #tpu.memory_space<smem>>
    %c58 = arith.constant 58 : index
    %58 = memref.load %arg5[%c58] : memref<98xf32, #tpu.memory_space<smem>>
    %c59 = arith.constant 59 : index
    %59 = memref.load %arg5[%c59] : memref<98xf32, #tpu.memory_space<smem>>
    %c60 = arith.constant 60 : index
    %60 = memref.load %arg5[%c60] : memref<98xf32, #tpu.memory_space<smem>>
    %c61 = arith.constant 61 : index
    %61 = memref.load %arg5[%c61] : memref<98xf32, #tpu.memory_space<smem>>
    %c62 = arith.constant 62 : index
    %62 = memref.load %arg5[%c62] : memref<98xf32, #tpu.memory_space<smem>>
    %c63 = arith.constant 63 : index
    %63 = memref.load %arg5[%c63] : memref<98xf32, #tpu.memory_space<smem>>
    %c64 = arith.constant 64 : index
    %64 = memref.load %arg5[%c64] : memref<98xf32, #tpu.memory_space<smem>>
    %c65 = arith.constant 65 : index
    %65 = memref.load %arg5[%c65] : memref<98xf32, #tpu.memory_space<smem>>
    %c66 = arith.constant 66 : index
    %66 = memref.load %arg5[%c66] : memref<98xf32, #tpu.memory_space<smem>>
    %c67 = arith.constant 67 : index
    %67 = memref.load %arg5[%c67] : memref<98xf32, #tpu.memory_space<smem>>
    %c68 = arith.constant 68 : index
    %68 = memref.load %arg5[%c68] : memref<98xf32, #tpu.memory_space<smem>>
    %c69 = arith.constant 69 : index
    %69 = memref.load %arg5[%c69] : memref<98xf32, #tpu.memory_space<smem>>
    %c70 = arith.constant 70 : index
    %70 = memref.load %arg5[%c70] : memref<98xf32, #tpu.memory_space<smem>>
    %c71 = arith.constant 71 : index
    %71 = memref.load %arg5[%c71] : memref<98xf32, #tpu.memory_space<smem>>
    %c72 = arith.constant 72 : index
    %72 = memref.load %arg5[%c72] : memref<98xf32, #tpu.memory_space<smem>>
    %c73 = arith.constant 73 : index
    %73 = memref.load %arg5[%c73] : memref<98xf32, #tpu.memory_space<smem>>
    %c74 = arith.constant 74 : index
    %74 = memref.load %arg5[%c74] : memref<98xf32, #tpu.memory_space<smem>>
    %c75 = arith.constant 75 : index
    %75 = memref.load %arg5[%c75] : memref<98xf32, #tpu.memory_space<smem>>
    %c76 = arith.constant 76 : index
    %76 = memref.load %arg5[%c76] : memref<98xf32, #tpu.memory_space<smem>>
    %c77 = arith.constant 77 : index
    %77 = memref.load %arg5[%c77] : memref<98xf32, #tpu.memory_space<smem>>
    %c78 = arith.constant 78 : index
    %78 = memref.load %arg5[%c78] : memref<98xf32, #tpu.memory_space<smem>>
    %c79 = arith.constant 79 : index
    %79 = memref.load %arg5[%c79] : memref<98xf32, #tpu.memory_space<smem>>
    %c80 = arith.constant 80 : index
    %80 = memref.load %arg5[%c80] : memref<98xf32, #tpu.memory_space<smem>>
    %c81 = arith.constant 81 : index
    %81 = memref.load %arg5[%c81] : memref<98xf32, #tpu.memory_space<smem>>
    %c82 = arith.constant 82 : index
    %82 = memref.load %arg5[%c82] : memref<98xf32, #tpu.memory_space<smem>>
    %c83 = arith.constant 83 : index
    %83 = memref.load %arg5[%c83] : memref<98xf32, #tpu.memory_space<smem>>
    %c84 = arith.constant 84 : index
    %84 = memref.load %arg5[%c84] : memref<98xf32, #tpu.memory_space<smem>>
    %c85 = arith.constant 85 : index
    %85 = memref.load %arg5[%c85] : memref<98xf32, #tpu.memory_space<smem>>
    %c86 = arith.constant 86 : index
    %86 = memref.load %arg5[%c86] : memref<98xf32, #tpu.memory_space<smem>>
    %c87 = arith.constant 87 : index
    %87 = memref.load %arg5[%c87] : memref<98xf32, #tpu.memory_space<smem>>
    %c88 = arith.constant 88 : index
    %88 = memref.load %arg5[%c88] : memref<98xf32, #tpu.memory_space<smem>>
    %c89 = arith.constant 89 : index
    %89 = memref.load %arg5[%c89] : memref<98xf32, #tpu.memory_space<smem>>
    %c90 = arith.constant 90 : index
    %90 = memref.load %arg5[%c90] : memref<98xf32, #tpu.memory_space<smem>>
    %c91 = arith.constant 91 : index
    %91 = memref.load %arg5[%c91] : memref<98xf32, #tpu.memory_space<smem>>
    %c92 = arith.constant 92 : index
    %92 = memref.load %arg5[%c92] : memref<98xf32, #tpu.memory_space<smem>>
    %c93 = arith.constant 93 : index
    %93 = memref.load %arg5[%c93] : memref<98xf32, #tpu.memory_space<smem>>
    %c94 = arith.constant 94 : index
    %94 = memref.load %arg5[%c94] : memref<98xf32, #tpu.memory_space<smem>>
    %c95 = arith.constant 95 : index
    %95 = memref.load %arg5[%c95] : memref<98xf32, #tpu.memory_space<smem>>
    %c96 = arith.constant 96 : index
    %96 = memref.load %arg5[%c96] : memref<98xf32, #tpu.memory_space<smem>>
    %c97 = arith.constant 97 : index
    %97 = memref.load %arg5[%c97] : memref<98xf32, #tpu.memory_space<smem>>
    %c0_0 = arith.constant 0 : index
    %c0_1 = arith.constant 0 : index
    %c0_2 = arith.constant 0 : index
    %98 = vector.load %arg1[%c0_0, %c0_1, %c0_2] : memref<1x32x256xf32, #tpu.memory_space<vmem>>, vector<1x32x256xf32>
    %cst = arith.constant dense<0.000000e+00> : vector<1x32xf32>
    %99 = vector.multi_reduction <add>, %98, %cst [2] : vector<1x32x256xf32> to vector<1x32xf32>
    %cst_3 = arith.constant 3.906250e-03 : f32
    %100 = vector.broadcast %cst_3 : f32 to vector<1x32xf32>
    %101 = arith.mulf %99, %100 : vector<1x32xf32>
    %c0_4 = arith.constant 0 : index
    %c0_5 = arith.constant 0 : index
    %102 = vector.load %arg2[%c0_4, %c0_5] : memref<32x2xf32, #tpu.memory_space<vmem>>, vector<32x2xf32>
    %cst_6 = arith.constant dense<0.000000e+00> : vector<1x2xf32>
    %103 = tpu.matmul %101, %102, %cst_6 {dimension_numbers = #tpu.dot_dimension_numbers<[1], [0], [0], [1], [0, 0, 1, 1], [], []>} : vector<1x32xf32>, vector<32x2xf32>, vector<1x2xf32> -> vector<1x2xf32>
    %cst_7 = arith.constant 0.000000e+00 : f32
    %104 = vector.broadcast %cst_7 : f32 to vector<1x2xf32>
    %105 = arith.maximumf %103, %104 : vector<1x2xf32>
    %c0_8 = arith.constant 0 : index
    %c0_9 = arith.constant 0 : index
    %106 = vector.load %arg3[%c0_8, %c0_9] : memref<2x32xf32, #tpu.memory_space<vmem>>, vector<2x32xf32>
    %cst_10 = arith.constant dense<0.000000e+00> : vector<1x32xf32>
    %107 = tpu.matmul %105, %106, %cst_10 {dimension_numbers = #tpu.dot_dimension_numbers<[1], [0], [0], [1], [0, 0, 1, 1], [], []>} : vector<1x2xf32>, vector<2x32xf32>, vector<1x32xf32> -> vector<1x32xf32>
    %108 = arith.negf %107 : vector<1x32xf32>
    %109 = math.exp %108 : vector<1x32xf32>
    %cst_11 = arith.constant 1.000000e+00 : f32
    %110 = vector.broadcast %cst_11 : f32 to vector<1x32xf32>
    %111 = arith.addf %110, %109 : vector<1x32xf32>
    %112 = arith.divf %110, %111 : vector<1x32xf32>
    %113 = vector.shape_cast %112 : vector<1x32xf32> to vector<1x32x1xf32>
    %114 = vector.broadcast %113 : vector<1x32x1xf32> to vector<1x32x256xf32>
    %115 = arith.mulf %98, %114 : vector<1x32x256xf32>
    %c0_12 = arith.constant 0 : index
    %c0_13 = arith.constant 0 : index
    %c0_14 = arith.constant 0 : index
    %116 = vector.load %arg6[%c0_12, %c0_13, %c0_14] : memref<1x32x256xf32, #tpu.memory_space<vmem>>, vector<1x32x256xf32>
    tpu.vector_store %arg6[%c0_12, %c0_13, %c0_14], %115 {strides = array<i32>} : memref<1x32x256xf32, #tpu.memory_space<vmem>>, vector<1x32x256xf32>,
    %c0_15 = arith.constant 0 : index
    %c0_16 = arith.constant 0 : index
    %c0_17 = arith.constant 0 : index
    %117 = vector.load %arg6[%c0_15, %c0_16, %c0_17] : memref<1x32x256xf32, #tpu.memory_space<vmem>>, vector<1x32x256xf32>
    %cst_18 = arith.constant dense<0.000000e+00> : vector<1x256xf32>
    %118 = vector.multi_reduction <add>, %117, %cst_18 [1] : vector<1x32x256xf32> to vector<1x256xf32>
    %cst_19 = arith.constant 3.200000e+01 : f32
    %119 = vector.broadcast %cst_19 : f32 to vector<1x256xf32>
    %120 = arith.divf %118, %119 : vector<1x256xf32>
    %cst_20 = arith.constant dense<0xFF800000> : vector<1x256xf32>
    %121 = vector.multi_reduction <maximumf>, %117, %cst_20 [1] : vector<1x32x256xf32> to vector<1x256xf32>
    %cst_21 = arith.constant 0.000000e+00 : f32
    %122 = vector.broadcast %cst_21 : f32 to vector<2x51xf32>
    %c0_22 = arith.constant 0 : index
    %c0_23 = arith.constant 0 : index
    %123 = vector.load %arg7[%c0_22, %c0_23] : memref<2x358xf32, #tpu.memory_space<vmem>>, vector<2x51xf32>
    tpu.vector_store %arg7[%c0_22, %c0_23], %122 {strides = array<i32>} : memref<2x358xf32, #tpu.memory_space<vmem>>, vector<2x51xf32>,
    %c0_24 = arith.constant 0 : index
    %c307 = arith.constant 307 : index
    %124 = vector.load %arg7[%c0_24, %c307] : memref<2x358xf32, #tpu.memory_space<vmem>>, vector<2x51xf32>
    tpu.vector_store %arg7[%c0_24, %c307], %122 {strides = array<i32>} : memref<2x358xf32, #tpu.memory_space<vmem>>, vector<2x51xf32>,
    %c0_25 = arith.constant 0 : index
    %c51_26 = arith.constant 51 : index
    %125 = vector.load %arg7[%c0_25, %c51_26] : memref<2x358xf32, #tpu.memory_space<vmem>>, vector<1x256xf32>
    tpu.vector_store %arg7[%c0_25, %c51_26], %120 {strides = array<i32>} : memref<2x358xf32, #tpu.memory_space<vmem>>, vector<1x256xf32>,
    %c1_27 = arith.constant 1 : index
    %c51_28 = arith.constant 51 : index
    %126 = vector.load %arg7[%c1_27, %c51_28] : memref<2x358xf32, #tpu.memory_space<vmem>>, vector<1x256xf32>
    tpu.vector_store %arg7[%c1_27, %c51_28], %121 {strides = array<i32>} : memref<2x358xf32, #tpu.memory_space<vmem>>, vector<1x256xf32>,
    %cst_29 = arith.constant 0.000000e+00 : f32
    %127 = vector.broadcast %cst_29 : f32 to vector<1x256xf32>
    %cst_30 = arith.constant 0.000000e+00 : f32
    %128 = vector.broadcast %cst_30 : f32 to vector<1x256xf32>
    %cst_31 = arith.constant 0.000000e+00 : f32
    %129 = vector.broadcast %cst_31 : f32 to vector<1x256xf32>
    %cst_32 = arith.constant 0.000000e+00 : f32
    %130 = vector.broadcast %cst_32 : f32 to vector<1x256xf32>
    %c0_33 = arith.constant 0 : index
    %c0_34 = arith.constant 0 : index
    %131 = vector.load %arg7[%c0_33, %c0_34] : memref<2x358xf32, #tpu.memory_space<vmem>>, vector<1x262xf32>
    %c1_35 = arith.constant 1 : index
    %c0_36 = arith.constant 0 : index
    %132 = vector.load %arg7[%c1_35, %c0_36] : memref<2x358xf32, #tpu.memory_space<vmem>>, vector<1x262xf32>
    %133 = vector.extract_strided_slice %131 {offsets = [0, 0], sizes = [1, 256], strides = [1, 1]} : vector<1x262xf32> to vector<1x256xf32>
    %134 = vector.broadcast %0 : f32 to vector<1x256xf32>
    %135 = arith.mulf %134, %133 : vector<1x256xf32>
    %136 = vector.extract_strided_slice %132 {offsets = [0, 0], sizes = [1, 256], strides = [1, 1]} : vector<1x262xf32> to vector<1x256xf32>
    %137 = vector.broadcast %49 : f32 to vector<1x256xf32>
    %138 = arith.mulf %137, %136 : vector<1x256xf32>
    %139 = arith.addf %135, %138 : vector<1x256xf32>
    %c0_37 = arith.constant 0 : index
    %c0_38 = arith.constant 0 : index
    %140 = vector.load %arg4[%c0_37, %c0_38] : memref<7x256xf32, #tpu.memory_space<vmem>>, vector<1x256xf32>
    %141 = arith.mulf %139, %140 : vector<1x256xf32>
    %142 = arith.addf %127, %141 : vector<1x256xf32>
    %143 = vector.extract_strided_slice %131 {offsets = [0, 1], sizes = [1, 256], strides = [1, 1]} : vector<1x262xf32> to vector<1x256xf32>
    %144 = vector.broadcast %1 : f32 to vector<1x256xf32>
    %145 = arith.mulf %144, %143 : vector<1x256xf32>
    %146 = vector.extract_strided_slice %132 {offsets = [0, 1], sizes = [1, 256], strides = [1, 1]} : vector<1x262xf32> to vector<1x256xf32>
    %147 = vector.broadcast %50 : f32 to vector<1x256xf32>
    %148 = arith.mulf %147, %146 : vector<1x256xf32>
    %149 = arith.addf %145, %148 : vector<1x256xf32>
    %c1_39 = arith.constant 1 : index
    %c0_40 = arith.constant 0 : index
    %150 = vector.load %arg4[%c1_39, %c0_40] : memref<7x256xf32, #tpu.memory_space<vmem>>, vector<1x256xf32>
    %151 = arith.mulf %149, %150 : vector<1x256xf32>
    %152 = arith.addf %128, %151 : vector<1x256xf32>
    %153 = vector.extract_strided_slice %131 {offsets = [0, 2], sizes = [1, 256], strides = [1, 1]} : vector<1x262xf32> to vector<1x256xf32>
    %154 = vector.broadcast %2 : f32 to vector<1x256xf32>
    %155 = arith.mulf %154, %153 : vector<1x256xf32>
    %156 = vector.extract_strided_slice %132 {offsets = [0, 2], sizes = [1, 256], strides = [1, 1]} : vector<1x262xf32> to vector<1x256xf32>
    %157 = vector.broadcast %51 : f32 to vector<1x256xf32>
    %158 = arith.mulf %157, %156 : vector<1x256xf32>
    %159 = arith.addf %155, %158 : vector<1x256xf32>
    %c2_41 = arith.constant 2 : index
    %c0_42 = arith.constant 0 : index
    %160 = vector.load %arg4[%c2_41, %c0_42] : memref<7x256xf32, #tpu.memory_space<vmem>>, vector<1x256xf32>
    %161 = arith.mulf %159, %160 : vector<1x256xf32>
    %162 = arith.addf %129, %161 : vector<1x256xf32>
    %163 = vector.extract_strided_slice %131 {offsets = [0, 3], sizes = [1, 256], strides = [1, 1]} : vector<1x262xf32> to vector<1x256xf32>
    %164 = vector.broadcast %3 : f32 to vector<1x256xf32>
    %165 = arith.mulf %164, %163 : vector<1x256xf32>
    %166 = vector.extract_strided_slice %132 {offsets = [0, 3], sizes = [1, 256], strides = [1, 1]} : vector<1x262xf32> to vector<1x256xf32>
    %167 = vector.broadcast %52 : f32 to vector<1x256xf32>
    %168 = arith.mulf %167, %166 : vector<1x256xf32>
    %169 = arith.addf %165, %168 : vector<1x256xf32>
    %170 = arith.addf %130, %169 : vector<1x256xf32>
    %171 = vector.extract_strided_slice %131 {offsets = [0, 4], sizes = [1, 256], strides = [1, 1]} : vector<1x262xf32> to vector<1x256xf32>
    %172 = vector.broadcast %4 : f32 to vector<1x256xf32>
    %173 = arith.mulf %172, %171 : vector<1x256xf32>
    %174 = vector.extract_strided_slice %132 {offsets = [0, 4], sizes = [1, 256], strides = [1, 1]} : vector<1x262xf32> to vector<1x256xf32>
    %175 = vector.broadcast %53 : f32 to vector<1x256xf32>
    %176 = arith.mulf %175, %174 : vector<1x256xf32>
    %177 = arith.addf %173, %176 : vector<1x256xf32>
    %c4_43 = arith.constant 4 : index
    %c0_44 = arith.constant 0 : index
    %178 = vector.load %arg4[%c4_43, %c0_44] : memref<7x256xf32, #tpu.memory_space<vmem>>, vector<1x256xf32>
    %179 = arith.mulf %177, %178 : vector<1x256xf32>
    %180 = arith.addf %142, %179 : vector<1x256xf32>
    %181 = vector.extract_strided_slice %131 {offsets = [0, 5], sizes = [1, 256], strides = [1, 1]} : vector<1x262xf32> to vector<1x256xf32>
    %182 = vector.broadcast %5 : f32 to vector<1x256xf32>
    %183 = arith.mulf %182, %181 : vector<1x256xf32>
    %184 = vector.extract_strided_slice %132 {offsets = [0, 5], sizes = [1, 256], strides = [1, 1]} : vector<1x262xf32> to vector<1x256xf32>
    %185 = vector.broadcast %54 : f32 to vector<1x256xf32>
    %186 = arith.mulf %185, %184 : vector<1x256xf32>
    %187 = arith.addf %183, %186 : vector<1x256xf32>
    %c5_45 = arith.constant 5 : index
    %c0_46 = arith.constant 0 : index
    %188 = vector.load %arg4[%c5_45, %c0_46] : memref<7x256xf32, #tpu.memory_space<vmem>>, vector<1x256xf32>
    %189 = arith.mulf %187, %188 : vector<1x256xf32>
    %190 = arith.addf %152, %189 : vector<1x256xf32>
    %191 = vector.extract_strided_slice %131 {offsets = [0, 6], sizes = [1, 256], strides = [1, 1]} : vector<1x262xf32> to vector<1x256xf32>
    %192 = vector.broadcast %6 : f32 to vector<1x256xf32>
    %193 = arith.mulf %192, %191 : vector<1x256xf32>
    %194 = vector.extract_strided_slice %132 {offsets = [0, 6], sizes = [1, 256], strides = [1, 1]} : vector<1x262xf32> to vector<1x256xf32>
    %195 = vector.broadcast %55 : f32 to vector<1x256xf32>
    %196 = arith.mulf %195, %194 : vector<1x256xf32>
    %197 = arith.addf %193, %196 : vector<1x256xf32>
    %c6_47 = arith.constant 6 : index
    %c0_48 = arith.constant 0 : index
    %198 = vector.load %arg4[%c6_47, %c0_48] : memref<7x256xf32, #tpu.memory_space<vmem>>, vector<1x256xf32>
    %199 = arith.mulf %197, %198 : vector<1x256xf32>
    %200 = arith.addf %162, %199 : vector<1x256xf32>
    %c0_49 = arith.constant 0 : index
    %c16_50 = arith.constant 16 : index
    %201 = vector.load %arg7[%c0_49, %c16_50] : memref<2x358xf32, #tpu.memory_space<vmem>>, vector<1x262xf32>
    %c1_51 = arith.constant 1 : index
    %c16_52 = arith.constant 16 : index
    %202 = vector.load %arg7[%c1_51, %c16_52] : memref<2x358xf32, #tpu.memory_space<vmem>>, vector<1x262xf32>
    %203 = vector.extract_strided_slice %201 {offsets = [0, 0], sizes = [1, 256], strides = [1, 1]} : vector<1x262xf32> to vector<1x256xf32>
    %204 = vector.broadcast %7 : f32 to vector<1x256xf32>
    %205 = arith.mulf %204, %203 : vector<1x256xf32>
    %206 = vector.extract_strided_slice %202 {offsets = [0, 0], sizes = [1, 256], strides = [1, 1]} : vector<1x262xf32> to vector<1x256xf32>
    %207 = vector.broadcast %56 : f32 to vector<1x256xf32>
    %208 = arith.mulf %207, %206 : vector<1x256xf32>
    %209 = arith.addf %205, %208 : vector<1x256xf32>
    %c0_53 = arith.constant 0 : index
    %c0_54 = arith.constant 0 : index
    %210 = vector.load %arg4[%c0_53, %c0_54] : memref<7x256xf32, #tpu.memory_space<vmem>>, vector<1x256xf32>
    %211 = arith.mulf %209, %210 : vector<1x256xf32>
    %212 = arith.addf %170, %211 : vector<1x256xf32>
    %213 = vector.extract_strided_slice %201 {offsets = [0, 1], sizes = [1, 256], strides = [1, 1]} : vector<1x262xf32> to vector<1x256xf32>
    %214 = vector.broadcast %8 : f32 to vector<1x256xf32>
    %215 = arith.mulf %214, %213 : vector<1x256xf32>
    %216 = vector.extract_strided_slice %202 {offsets = [0, 1], sizes = [1, 256], strides = [1, 1]} : vector<1x262xf32> to vector<1x256xf32>
    %217 = vector.broadcast %57 : f32 to vector<1x256xf32>
    %218 = arith.mulf %217, %216 : vector<1x256xf32>
    %219 = arith.addf %215, %218 : vector<1x256xf32>
    %c1_55 = arith.constant 1 : index
    %c0_56 = arith.constant 0 : index
    %220 = vector.load %arg4[%c1_55, %c0_56] : memref<7x256xf32, #tpu.memory_space<vmem>>, vector<1x256xf32>
    %221 = arith.mulf %219, %220 : vector<1x256xf32>
    %222 = arith.addf %180, %221 : vector<1x256xf32>
    %223 = vector.extract_strided_slice %201 {offsets = [0, 2], sizes = [1, 256], strides = [1, 1]} : vector<1x262xf32> to vector<1x256xf32>
    %224 = vector.broadcast %9 : f32 to vector<1x256xf32>
    %225 = arith.mulf %224, %223 : vector<1x256xf32>
    %226 = vector.extract_strided_slice %202 {offsets = [0, 2], sizes = [1, 256], strides = [1, 1]} : vector<1x262xf32> to vector<1x256xf32>
    %227 = vector.broadcast %58 : f32 to vector<1x256xf32>
    %228 = arith.mulf %227, %226 : vector<1x256xf32>
    %229 = arith.addf %225, %228 : vector<1x256xf32>
    %c2_57 = arith.constant 2 : index
    %c0_58 = arith.constant 0 : index
    %230 = vector.load %arg4[%c2_57, %c0_58] : memref<7x256xf32, #tpu.memory_space<vmem>>, vector<1x256xf32>
    %231 = arith.mulf %229, %230 : vector<1x256xf32>
    %232 = arith.addf %190, %231 : vector<1x256xf32>
    %233 = vector.extract_strided_slice %201 {offsets = [0, 3], sizes = [1, 256], strides = [1, 1]} : vector<1x262xf32> to vector<1x256xf32>
    %234 = vector.broadcast %10 : f32 to vector<1x256xf32>
    %235 = arith.mulf %234, %233 : vector<1x256xf32>
    %236 = vector.extract_strided_slice %202 {offsets = [0, 3], sizes = [1, 256], strides = [1, 1]} : vector<1x262xf32> to vector<1x256xf32>
    %237 = vector.broadcast %59 : f32 to vector<1x256xf32>
    %238 = arith.mulf %237, %236 : vector<1x256xf32>
    %239 = arith.addf %235, %238 : vector<1x256xf32>
    %240 = arith.addf %200, %239 : vector<1x256xf32>
    %241 = vector.extract_strided_slice %201 {offsets = [0, 4], sizes = [1, 256], strides = [1, 1]} : vector<1x262xf32> to vector<1x256xf32>
    %242 = vector.broadcast %11 : f32 to vector<1x256xf32>
    %243 = arith.mulf %242, %241 : vector<1x256xf32>
    %244 = vector.extract_strided_slice %202 {offsets = [0, 4], sizes = [1, 256], strides = [1, 1]} : vector<1x262xf32> to vector<1x256xf32>
    %245 = vector.broadcast %60 : f32 to vector<1x256xf32>
    %246 = arith.mulf %245, %244 : vector<1x256xf32>
    %247 = arith.addf %243, %246 : vector<1x256xf32>
    %c4_59 = arith.constant 4 : index
    %c0_60 = arith.constant 0 : index
    %248 = vector.load %arg4[%c4_59, %c0_60] : memref<7x256xf32, #tpu.memory_space<vmem>>, vector<1x256xf32>
    %249 = arith.mulf %247, %248 : vector<1x256xf32>
    %250 = arith.addf %212, %249 : vector<1x256xf32>
    %251 = vector.extract_strided_slice %201 {offsets = [0, 5], sizes = [1, 256], strides = [1, 1]} : vector<1x262xf32> to vector<1x256xf32>
    %252 = vector.broadcast %12 : f32 to vector<1x256xf32>
    %253 = arith.mulf %252, %251 : vector<1x256xf32>
    %254 = vector.extract_strided_slice %202 {offsets = [0, 5], sizes = [1, 256], strides = [1, 1]} : vector<1x262xf32> to vector<1x256xf32>
    %255 = vector.broadcast %61 : f32 to vector<1x256xf32>
    %256 = arith.mulf %255, %254 : vector<1x256xf32>
    %257 = arith.addf %253, %256 : vector<1x256xf32>
    %c5_61 = arith.constant 5 : index
    %c0_62 = arith.constant 0 : index
    %258 = vector.load %arg4[%c5_61, %c0_62] : memref<7x256xf32, #tpu.memory_space<vmem>>, vector<1x256xf32>
    %259 = arith.mulf %257, %258 : vector<1x256xf32>
    %260 = arith.addf %222, %259 : vector<1x256xf32>
    %261 = vector.extract_strided_slice %201 {offsets = [0, 6], sizes = [1, 256], strides = [1, 1]} : vector<1x262xf32> to vector<1x256xf32>
    %262 = vector.broadcast %13 : f32 to vector<1x256xf32>
    %263 = arith.mulf %262, %261 : vector<1x256xf32>
    %264 = vector.extract_strided_slice %202 {offsets = [0, 6], sizes = [1, 256], strides = [1, 1]} : vector<1x262xf32> to vector<1x256xf32>
    %265 = vector.broadcast %62 : f32 to vector<1x256xf32>
    %266 = arith.mulf %265, %264 : vector<1x256xf32>
    %267 = arith.addf %263, %266 : vector<1x256xf32>
    %c6_63 = arith.constant 6 : index
    %c0_64 = arith.constant 0 : index
    %268 = vector.load %arg4[%c6_63, %c0_64] : memref<7x256xf32, #tpu.memory_space<vmem>>, vector<1x256xf32>
    %269 = arith.mulf %267, %268 : vector<1x256xf32>
    %270 = arith.addf %232, %269 : vector<1x256xf32>
    %c0_65 = arith.constant 0 : index
    %c32_66 = arith.constant 32 : index
    %271 = vector.load %arg7[%c0_65, %c32_66] : memref<2x358xf32, #tpu.memory_space<vmem>>, vector<1x262xf32>
    %c1_67 = arith.constant 1 : index
    %c32_68 = arith.constant 32 : index
    %272 = vector.load %arg7[%c1_67, %c32_68] : memref<2x358xf32, #tpu.memory_space<vmem>>, vector<1x262xf32>
    %273 = vector.extract_strided_slice %271 {offsets = [0, 0], sizes = [1, 256], strides = [1, 1]} : vector<1x262xf32> to vector<1x256xf32>
    %274 = vector.broadcast %14 : f32 to vector<1x256xf32>
    %275 = arith.mulf %274, %273 : vector<1x256xf32>
    %276 = vector.extract_strided_slice %272 {offsets = [0, 0], sizes = [1, 256], strides = [1, 1]} : vector<1x262xf32> to vector<1x256xf32>
    %277 = vector.broadcast %63 : f32 to vector<1x256xf32>
    %278 = arith.mulf %277, %276 : vector<1x256xf32>
    %279 = arith.addf %275, %278 : vector<1x256xf32>
    %c0_69 = arith.constant 0 : index
    %c0_70 = arith.constant 0 : index
    %280 = vector.load %arg4[%c0_69, %c0_70] : memref<7x256xf32, #tpu.memory_space<vmem>>, vector<1x256xf32>
    %281 = arith.mulf %279, %280 : vector<1x256xf32>
    %282 = arith.addf %240, %281 : vector<1x256xf32>
    %283 = vector.extract_strided_slice %271 {offsets = [0, 1], sizes = [1, 256], strides = [1, 1]} : vector<1x262xf32> to vector<1x256xf32>
    %284 = vector.broadcast %15 : f32 to vector<1x256xf32>
    %285 = arith.mulf %284, %283 : vector<1x256xf32>
    %286 = vector.extract_strided_slice %272 {offsets = [0, 1], sizes = [1, 256], strides = [1, 1]} : vector<1x262xf32> to vector<1x256xf32>
    %287 = vector.broadcast %64 : f32 to vector<1x256xf32>
    %288 = arith.mulf %287, %286 : vector<1x256xf32>
    %289 = arith.addf %285, %288 : vector<1x256xf32>
    %c1_71 = arith.constant 1 : index
    %c0_72 = arith.constant 0 : index
    %290 = vector.load %arg4[%c1_71, %c0_72] : memref<7x256xf32, #tpu.memory_space<vmem>>, vector<1x256xf32>
    %291 = arith.mulf %289, %290 : vector<1x256xf32>
    %292 = arith.addf %250, %291 : vector<1x256xf32>
    %293 = vector.extract_strided_slice %271 {offsets = [0, 2], sizes = [1, 256], strides = [1, 1]} : vector<1x262xf32> to vector<1x256xf32>
    %294 = vector.broadcast %16 : f32 to vector<1x256xf32>
    %295 = arith.mulf %294, %293 : vector<1x256xf32>
    %296 = vector.extract_strided_slice %272 {offsets = [0, 2], sizes = [1, 256], strides = [1, 1]} : vector<1x262xf32> to vector<1x256xf32>
    %297 = vector.broadcast %65 : f32 to vector<1x256xf32>
    %298 = arith.mulf %297, %296 : vector<1x256xf32>
    %299 = arith.addf %295, %298 : vector<1x256xf32>
    %c2_73 = arith.constant 2 : index
    %c0_74 = arith.constant 0 : index
    %300 = vector.load %arg4[%c2_73, %c0_74] : memref<7x256xf32, #tpu.memory_space<vmem>>, vector<1x256xf32>
    %301 = arith.mulf %299, %300 : vector<1x256xf32>
    %302 = arith.addf %260, %301 : vector<1x256xf32>
    %303 = vector.extract_strided_slice %271 {offsets = [0, 3], sizes = [1, 256], strides = [1, 1]} : vector<1x262xf32> to vector<1x256xf32>
    %304 = vector.broadcast %17 : f32 to vector<1x256xf32>
    %305 = arith.mulf %304, %303 : vector<1x256xf32>
    %306 = vector.extract_strided_slice %272 {offsets = [0, 3], sizes = [1, 256], strides = [1, 1]} : vector<1x262xf32> to vector<1x256xf32>
    %307 = vector.broadcast %66 : f32 to vector<1x256xf32>
    %308 = arith.mulf %307, %306 : vector<1x256xf32>
    %309 = arith.addf %305, %308 : vector<1x256xf32>
    %310 = arith.addf %270, %309 : vector<1x256xf32>
    %311 = vector.extract_strided_slice %271 {offsets = [0, 4], sizes = [1, 256], strides = [1, 1]} : vector<1x262xf32> to vector<1x256xf32>
    %312 = vector.broadcast %18 : f32 to vector<1x256xf32>
    %313 = arith.mulf %312, %311 : vector<1x256xf32>
    %314 = vector.extract_strided_slice %272 {offsets = [0, 4], sizes = [1, 256], strides = [1, 1]} : vector<1x262xf32> to vector<1x256xf32>
    %315 = vector.broadcast %67 : f32 to vector<1x256xf32>
    %316 = arith.mulf %315, %314 : vector<1x256xf32>
    %317 = arith.addf %313, %316 : vector<1x256xf32>
    %c4_75 = arith.constant 4 : index
    %c0_76 = arith.constant 0 : index
    %318 = vector.load %arg4[%c4_75, %c0_76] : memref<7x256xf32, #tpu.memory_space<vmem>>, vector<1x256xf32>
    %319 = arith.mulf %317, %318 : vector<1x256xf32>
    %320 = arith.addf %282, %319 : vector<1x256xf32>
    %321 = vector.extract_strided_slice %271 {offsets = [0, 5], sizes = [1, 256], strides = [1, 1]} : vector<1x262xf32> to vector<1x256xf32>
    %322 = vector.broadcast %19 : f32 to vector<1x256xf32>
    %323 = arith.mulf %322, %321 : vector<1x256xf32>
    %324 = vector.extract_strided_slice %272 {offsets = [0, 5], sizes = [1, 256], strides = [1, 1]} : vector<1x262xf32> to vector<1x256xf32>
    %325 = vector.broadcast %68 : f32 to vector<1x256xf32>
    %326 = arith.mulf %325, %324 : vector<1x256xf32>
    %327 = arith.addf %323, %326 : vector<1x256xf32>
    %c5_77 = arith.constant 5 : index
    %c0_78 = arith.constant 0 : index
    %328 = vector.load %arg4[%c5_77, %c0_78] : memref<7x256xf32, #tpu.memory_space<vmem>>, vector<1x256xf32>
    %329 = arith.mulf %327, %328 : vector<1x256xf32>
    %330 = arith.addf %292, %329 : vector<1x256xf32>
    %331 = vector.extract_strided_slice %271 {offsets = [0, 6], sizes = [1, 256], strides = [1, 1]} : vector<1x262xf32> to vector<1x256xf32>
    %332 = vector.broadcast %20 : f32 to vector<1x256xf32>
    %333 = arith.mulf %332, %331 : vector<1x256xf32>
    %334 = vector.extract_strided_slice %272 {offsets = [0, 6], sizes = [1, 256], strides = [1, 1]} : vector<1x262xf32> to vector<1x256xf32>
    %335 = vector.broadcast %69 : f32 to vector<1x256xf32>
    %336 = arith.mulf %335, %334 : vector<1x256xf32>
    %337 = arith.addf %333, %336 : vector<1x256xf32>
    %c6_79 = arith.constant 6 : index
    %c0_80 = arith.constant 0 : index
    %338 = vector.load %arg4[%c6_79, %c0_80] : memref<7x256xf32, #tpu.memory_space<vmem>>, vector<1x256xf32>
    %339 = arith.mulf %337, %338 : vector<1x256xf32>
    %340 = arith.addf %302, %339 : vector<1x256xf32>
    %c0_81 = arith.constant 0 : index
    %c48_82 = arith.constant 48 : index
    %341 = vector.load %arg7[%c0_81, %c48_82] : memref<2x358xf32, #tpu.memory_space<vmem>>, vector<1x262xf32>
    %c1_83 = arith.constant 1 : index
    %c48_84 = arith.constant 48 : index
    %342 = vector.load %arg7[%c1_83, %c48_84] : memref<2x358xf32, #tpu.memory_space<vmem>>, vector<1x262xf32>
    %343 = vector.extract_strided_slice %341 {offsets = [0, 0], sizes = [1, 256], strides = [1, 1]} : vector<1x262xf32> to vector<1x256xf32>
    %344 = vector.broadcast %21 : f32 to vector<1x256xf32>
    %345 = arith.mulf %344, %343 : vector<1x256xf32>
    %346 = vector.extract_strided_slice %342 {offsets = [0, 0], sizes = [1, 256], strides = [1, 1]} : vector<1x262xf32> to vector<1x256xf32>
    %347 = vector.broadcast %70 : f32 to vector<1x256xf32>
    %348 = arith.mulf %347, %346 : vector<1x256xf32>
    %349 = arith.addf %345, %348 : vector<1x256xf32>
    %c0_85 = arith.constant 0 : index
    %c0_86 = arith.constant 0 : index
    %350 = vector.load %arg4[%c0_85, %c0_86] : memref<7x256xf32, #tpu.memory_space<vmem>>, vector<1x256xf32>
    %351 = arith.mulf %349, %350 : vector<1x256xf32>
    %352 = arith.addf %310, %351 : vector<1x256xf32>
    %353 = vector.extract_strided_slice %341 {offsets = [0, 1], sizes = [1, 256], strides = [1, 1]} : vector<1x262xf32> to vector<1x256xf32>
    %354 = vector.broadcast %22 : f32 to vector<1x256xf32>
    %355 = arith.mulf %354, %353 : vector<1x256xf32>
    %356 = vector.extract_strided_slice %342 {offsets = [0, 1], sizes = [1, 256], strides = [1, 1]} : vector<1x262xf32> to vector<1x256xf32>
    %357 = vector.broadcast %71 : f32 to vector<1x256xf32>
    %358 = arith.mulf %357, %356 : vector<1x256xf32>
    %359 = arith.addf %355, %358 : vector<1x256xf32>
    %c1_87 = arith.constant 1 : index
    %c0_88 = arith.constant 0 : index
    %360 = vector.load %arg4[%c1_87, %c0_88] : memref<7x256xf32, #tpu.memory_space<vmem>>, vector<1x256xf32>
    %361 = arith.mulf %359, %360 : vector<1x256xf32>
    %362 = arith.addf %320, %361 : vector<1x256xf32>
    %363 = vector.extract_strided_slice %341 {offsets = [0, 2], sizes = [1, 256], strides = [1, 1]} : vector<1x262xf32> to vector<1x256xf32>
    %364 = vector.broadcast %23 : f32 to vector<1x256xf32>
    %365 = arith.mulf %364, %363 : vector<1x256xf32>
    %366 = vector.extract_strided_slice %342 {offsets = [0, 2], sizes = [1, 256], strides = [1, 1]} : vector<1x262xf32> to vector<1x256xf32>
    %367 = vector.broadcast %72 : f32 to vector<1x256xf32>
    %368 = arith.mulf %367, %366 : vector<1x256xf32>
    %369 = arith.addf %365, %368 : vector<1x256xf32>
    %c2_89 = arith.constant 2 : index
    %c0_90 = arith.constant 0 : index
    %370 = vector.load %arg4[%c2_89, %c0_90] : memref<7x256xf32, #tpu.memory_space<vmem>>, vector<1x256xf32>
    %371 = arith.mulf %369, %370 : vector<1x256xf32>
    %372 = arith.addf %330, %371 : vector<1x256xf32>
    %373 = vector.extract_strided_slice %341 {offsets = [0, 3], sizes = [1, 256], strides = [1, 1]} : vector<1x262xf32> to vector<1x256xf32>
    %374 = vector.broadcast %24 : f32 to vector<1x256xf32>
    %375 = arith.mulf %374, %373 : vector<1x256xf32>
    %376 = vector.extract_strided_slice %342 {offsets = [0, 3], sizes = [1, 256], strides = [1, 1]} : vector<1x262xf32> to vector<1x256xf32>
    %377 = vector.broadcast %73 : f32 to vector<1x256xf32>
    %378 = arith.mulf %377, %376 : vector<1x256xf32>
    %379 = arith.addf %375, %378 : vector<1x256xf32>
    %380 = arith.addf %340, %379 : vector<1x256xf32>
    %381 = vector.extract_strided_slice %341 {offsets = [0, 4], sizes = [1, 256], strides = [1, 1]} : vector<1x262xf32> to vector<1x256xf32>
    %382 = vector.broadcast %25 : f32 to vector<1x256xf32>
    %383 = arith.mulf %382, %381 : vector<1x256xf32>
    %384 = vector.extract_strided_slice %342 {offsets = [0, 4], sizes = [1, 256], strides = [1, 1]} : vector<1x262xf32> to vector<1x256xf32>
    %385 = vector.broadcast %74 : f32 to vector<1x256xf32>
    %386 = arith.mulf %385, %384 : vector<1x256xf32>
    %387 = arith.addf %383, %386 : vector<1x256xf32>
    %c4_91 = arith.constant 4 : index
    %c0_92 = arith.constant 0 : index
    %388 = vector.load %arg4[%c4_91, %c0_92] : memref<7x256xf32, #tpu.memory_space<vmem>>, vector<1x256xf32>
    %389 = arith.mulf %387, %388 : vector<1x256xf32>
    %390 = arith.addf %352, %389 : vector<1x256xf32>
    %391 = vector.extract_strided_slice %341 {offsets = [0, 5], sizes = [1, 256], strides = [1, 1]} : vector<1x262xf32> to vector<1x256xf32>
    %392 = vector.broadcast %26 : f32 to vector<1x256xf32>
    %393 = arith.mulf %392, %391 : vector<1x256xf32>
    %394 = vector.extract_strided_slice %342 {offsets = [0, 5], sizes = [1, 256], strides = [1, 1]} : vector<1x262xf32> to vector<1x256xf32>
    %395 = vector.broadcast %75 : f32 to vector<1x256xf32>
    %396 = arith.mulf %395, %394 : vector<1x256xf32>
    %397 = arith.addf %393, %396 : vector<1x256xf32>
    %c5_93 = arith.constant 5 : index
    %c0_94 = arith.constant 0 : index
    %398 = vector.load %arg4[%c5_93, %c0_94] : memref<7x256xf32, #tpu.memory_space<vmem>>, vector<1x256xf32>
    %399 = arith.mulf %397, %398 : vector<1x256xf32>
    %400 = arith.addf %362, %399 : vector<1x256xf32>
    %401 = vector.extract_strided_slice %341 {offsets = [0, 6], sizes = [1, 256], strides = [1, 1]} : vector<1x262xf32> to vector<1x256xf32>
    %402 = vector.broadcast %27 : f32 to vector<1x256xf32>
    %403 = arith.mulf %402, %401 : vector<1x256xf32>
    %404 = vector.extract_strided_slice %342 {offsets = [0, 6], sizes = [1, 256], strides = [1, 1]} : vector<1x262xf32> to vector<1x256xf32>
    %405 = vector.broadcast %76 : f32 to vector<1x256xf32>
    %406 = arith.mulf %405, %404 : vector<1x256xf32>
    %407 = arith.addf %403, %406 : vector<1x256xf32>
    %c6_95 = arith.constant 6 : index
    %c0_96 = arith.constant 0 : index
    %408 = vector.load %arg4[%c6_95, %c0_96] : memref<7x256xf32, #tpu.memory_space<vmem>>, vector<1x256xf32>
    %409 = arith.mulf %407, %408 : vector<1x256xf32>
    %410 = arith.addf %372, %409 : vector<1x256xf32>
    %c0_97 = arith.constant 0 : index
    %c64_98 = arith.constant 64 : index
    %411 = vector.load %arg7[%c0_97, %c64_98] : memref<2x358xf32, #tpu.memory_space<vmem>>, vector<1x262xf32>
    %c1_99 = arith.constant 1 : index
    %c64_100 = arith.constant 64 : index
    %412 = vector.load %arg7[%c1_99, %c64_100] : memref<2x358xf32, #tpu.memory_space<vmem>>, vector<1x262xf32>
    %413 = vector.extract_strided_slice %411 {offsets = [0, 0], sizes = [1, 256], strides = [1, 1]} : vector<1x262xf32> to vector<1x256xf32>
    %414 = vector.broadcast %28 : f32 to vector<1x256xf32>
    %415 = arith.mulf %414, %413 : vector<1x256xf32>
    %416 = vector.extract_strided_slice %412 {offsets = [0, 0], sizes = [1, 256], strides = [1, 1]} : vector<1x262xf32> to vector<1x256xf32>
    %417 = vector.broadcast %77 : f32 to vector<1x256xf32>
    %418 = arith.mulf %417, %416 : vector<1x256xf32>
    %419 = arith.addf %415, %418 : vector<1x256xf32>
    %c0_101 = arith.constant 0 : index
    %c0_102 = arith.constant 0 : index
    %420 = vector.load %arg4[%c0_101, %c0_102] : memref<7x256xf32, #tpu.memory_space<vmem>>, vector<1x256xf32>
    %421 = arith.mulf %419, %420 : vector<1x256xf32>
    %422 = arith.addf %380, %421 : vector<1x256xf32>
    %423 = vector.extract_strided_slice %411 {offsets = [0, 1], sizes = [1, 256], strides = [1, 1]} : vector<1x262xf32> to vector<1x256xf32>
    %424 = vector.broadcast %29 : f32 to vector<1x256xf32>
    %425 = arith.mulf %424, %423 : vector<1x256xf32>
    %426 = vector.extract_strided_slice %412 {offsets = [0, 1], sizes = [1, 256], strides = [1, 1]} : vector<1x262xf32> to vector<1x256xf32>
    %427 = vector.broadcast %78 : f32 to vector<1x256xf32>
    %428 = arith.mulf %427, %426 : vector<1x256xf32>
    %429 = arith.addf %425, %428 : vector<1x256xf32>
    %c1_103 = arith.constant 1 : index
    %c0_104 = arith.constant 0 : index
    %430 = vector.load %arg4[%c1_103, %c0_104] : memref<7x256xf32, #tpu.memory_space<vmem>>, vector<1x256xf32>
    %431 = arith.mulf %429, %430 : vector<1x256xf32>
    %432 = arith.addf %390, %431 : vector<1x256xf32>
    %433 = vector.extract_strided_slice %411 {offsets = [0, 2], sizes = [1, 256], strides = [1, 1]} : vector<1x262xf32> to vector<1x256xf32>
    %434 = vector.broadcast %30 : f32 to vector<1x256xf32>
    %435 = arith.mulf %434, %433 : vector<1x256xf32>
    %436 = vector.extract_strided_slice %412 {offsets = [0, 2], sizes = [1, 256], strides = [1, 1]} : vector<1x262xf32> to vector<1x256xf32>
    %437 = vector.broadcast %79 : f32 to vector<1x256xf32>
    %438 = arith.mulf %437, %436 : vector<1x256xf32>
    %439 = arith.addf %435, %438 : vector<1x256xf32>
    %c2_105 = arith.constant 2 : index
    %c0_106 = arith.constant 0 : index
    %440 = vector.load %arg4[%c2_105, %c0_106] : memref<7x256xf32, #tpu.memory_space<vmem>>, vector<1x256xf32>
    %441 = arith.mulf %439, %440 : vector<1x256xf32>
    %442 = arith.addf %400, %441 : vector<1x256xf32>
    %443 = vector.extract_strided_slice %411 {offsets = [0, 3], sizes = [1, 256], strides = [1, 1]} : vector<1x262xf32> to vector<1x256xf32>
    %444 = vector.broadcast %31 : f32 to vector<1x256xf32>
    %445 = arith.mulf %444, %443 : vector<1x256xf32>
    %446 = vector.extract_strided_slice %412 {offsets = [0, 3], sizes = [1, 256], strides = [1, 1]} : vector<1x262xf32> to vector<1x256xf32>
    %447 = vector.broadcast %80 : f32 to vector<1x256xf32>
    %448 = arith.mulf %447, %446 : vector<1x256xf32>
    %449 = arith.addf %445, %448 : vector<1x256xf32>
    %450 = arith.addf %410, %449 : vector<1x256xf32>
    %451 = vector.extract_strided_slice %411 {offsets = [0, 4], sizes = [1, 256], strides = [1, 1]} : vector<1x262xf32> to vector<1x256xf32>
    %452 = vector.broadcast %32 : f32 to vector<1x256xf32>
    %453 = arith.mulf %452, %451 : vector<1x256xf32>
    %454 = vector.extract_strided_slice %412 {offsets = [0, 4], sizes = [1, 256], strides = [1, 1]} : vector<1x262xf32> to vector<1x256xf32>
    %455 = vector.broadcast %81 : f32 to vector<1x256xf32>
    %456 = arith.mulf %455, %454 : vector<1x256xf32>
    %457 = arith.addf %453, %456 : vector<1x256xf32>
    %c4_107 = arith.constant 4 : index
    %c0_108 = arith.constant 0 : index
    %458 = vector.load %arg4[%c4_107, %c0_108] : memref<7x256xf32, #tpu.memory_space<vmem>>, vector<1x256xf32>
    %459 = arith.mulf %457, %458 : vector<1x256xf32>
    %460 = arith.addf %422, %459 : vector<1x256xf32>
    %461 = vector.extract_strided_slice %411 {offsets = [0, 5], sizes = [1, 256], strides = [1, 1]} : vector<1x262xf32> to vector<1x256xf32>
    %462 = vector.broadcast %33 : f32 to vector<1x256xf32>
    %463 = arith.mulf %462, %461 : vector<1x256xf32>
    %464 = vector.extract_strided_slice %412 {offsets = [0, 5], sizes = [1, 256], strides = [1, 1]} : vector<1x262xf32> to vector<1x256xf32>
    %465 = vector.broadcast %82 : f32 to vector<1x256xf32>
    %466 = arith.mulf %465, %464 : vector<1x256xf32>
    %467 = arith.addf %463, %466 : vector<1x256xf32>
    %c5_109 = arith.constant 5 : index
    %c0_110 = arith.constant 0 : index
    %468 = vector.load %arg4[%c5_109, %c0_110] : memref<7x256xf32, #tpu.memory_space<vmem>>, vector<1x256xf32>
    %469 = arith.mulf %467, %468 : vector<1x256xf32>
    %470 = arith.addf %432, %469 : vector<1x256xf32>
    %471 = vector.extract_strided_slice %411 {offsets = [0, 6], sizes = [1, 256], strides = [1, 1]} : vector<1x262xf32> to vector<1x256xf32>
    %472 = vector.broadcast %34 : f32 to vector<1x256xf32>
    %473 = arith.mulf %472, %471 : vector<1x256xf32>
    %474 = vector.extract_strided_slice %412 {offsets = [0, 6], sizes = [1, 256], strides = [1, 1]} : vector<1x262xf32> to vector<1x256xf32>
    %475 = vector.broadcast %83 : f32 to vector<1x256xf32>
    %476 = arith.mulf %475, %474 : vector<1x256xf32>
    %477 = arith.addf %473, %476 : vector<1x256xf32>
    %c6_111 = arith.constant 6 : index
    %c0_112 = arith.constant 0 : index
    %478 = vector.load %arg4[%c6_111, %c0_112] : memref<7x256xf32, #tpu.memory_space<vmem>>, vector<1x256xf32>
    %479 = arith.mulf %477, %478 : vector<1x256xf32>
    %480 = arith.addf %442, %479 : vector<1x256xf32>
    %c0_113 = arith.constant 0 : index
    %c80_114 = arith.constant 80 : index
    %481 = vector.load %arg7[%c0_113, %c80_114] : memref<2x358xf32, #tpu.memory_space<vmem>>, vector<1x262xf32>
    %c1_115 = arith.constant 1 : index
    %c80_116 = arith.constant 80 : index
    %482 = vector.load %arg7[%c1_115, %c80_116] : memref<2x358xf32, #tpu.memory_space<vmem>>, vector<1x262xf32>
    %483 = vector.extract_strided_slice %481 {offsets = [0, 0], sizes = [1, 256], strides = [1, 1]} : vector<1x262xf32> to vector<1x256xf32>
    %484 = vector.broadcast %35 : f32 to vector<1x256xf32>
    %485 = arith.mulf %484, %483 : vector<1x256xf32>
    %486 = vector.extract_strided_slice %482 {offsets = [0, 0], sizes = [1, 256], strides = [1, 1]} : vector<1x262xf32> to vector<1x256xf32>
    %487 = vector.broadcast %84 : f32 to vector<1x256xf32>
    %488 = arith.mulf %487, %486 : vector<1x256xf32>
    %489 = arith.addf %485, %488 : vector<1x256xf32>
    %c0_117 = arith.constant 0 : index
    %c0_118 = arith.constant 0 : index
    %490 = vector.load %arg4[%c0_117, %c0_118] : memref<7x256xf32, #tpu.memory_space<vmem>>, vector<1x256xf32>
    %491 = arith.mulf %489, %490 : vector<1x256xf32>
    %492 = arith.addf %450, %491 : vector<1x256xf32>
    %493 = vector.extract_strided_slice %481 {offsets = [0, 1], sizes = [1, 256], strides = [1, 1]} : vector<1x262xf32> to vector<1x256xf32>
    %494 = vector.broadcast %36 : f32 to vector<1x256xf32>
    %495 = arith.mulf %494, %493 : vector<1x256xf32>
    %496 = vector.extract_strided_slice %482 {offsets = [0, 1], sizes = [1, 256], strides = [1, 1]} : vector<1x262xf32> to vector<1x256xf32>
    %497 = vector.broadcast %85 : f32 to vector<1x256xf32>
    %498 = arith.mulf %497, %496 : vector<1x256xf32>
    %499 = arith.addf %495, %498 : vector<1x256xf32>
    %c1_119 = arith.constant 1 : index
    %c0_120 = arith.constant 0 : index
    %500 = vector.load %arg4[%c1_119, %c0_120] : memref<7x256xf32, #tpu.memory_space<vmem>>, vector<1x256xf32>
    %501 = arith.mulf %499, %500 : vector<1x256xf32>
    %502 = arith.addf %460, %501 : vector<1x256xf32>
    %503 = vector.extract_strided_slice %481 {offsets = [0, 2], sizes = [1, 256], strides = [1, 1]} : vector<1x262xf32> to vector<1x256xf32>
    %504 = vector.broadcast %37 : f32 to vector<1x256xf32>
    %505 = arith.mulf %504, %503 : vector<1x256xf32>
    %506 = vector.extract_strided_slice %482 {offsets = [0, 2], sizes = [1, 256], strides = [1, 1]} : vector<1x262xf32> to vector<1x256xf32>
    %507 = vector.broadcast %86 : f32 to vector<1x256xf32>
    %508 = arith.mulf %507, %506 : vector<1x256xf32>
    %509 = arith.addf %505, %508 : vector<1x256xf32>
    %c2_121 = arith.constant 2 : index
    %c0_122 = arith.constant 0 : index
    %510 = vector.load %arg4[%c2_121, %c0_122] : memref<7x256xf32, #tpu.memory_space<vmem>>, vector<1x256xf32>
    %511 = arith.mulf %509, %510 : vector<1x256xf32>
    %512 = arith.addf %470, %511 : vector<1x256xf32>
    %513 = vector.extract_strided_slice %481 {offsets = [0, 3], sizes = [1, 256], strides = [1, 1]} : vector<1x262xf32> to vector<1x256xf32>
    %514 = vector.broadcast %38 : f32 to vector<1x256xf32>
    %515 = arith.mulf %514, %513 : vector<1x256xf32>
    %516 = vector.extract_strided_slice %482 {offsets = [0, 3], sizes = [1, 256], strides = [1, 1]} : vector<1x262xf32> to vector<1x256xf32>
    %517 = vector.broadcast %87 : f32 to vector<1x256xf32>
    %518 = arith.mulf %517, %516 : vector<1x256xf32>
    %519 = arith.addf %515, %518 : vector<1x256xf32>
    %520 = arith.addf %480, %519 : vector<1x256xf32>
    %521 = vector.extract_strided_slice %481 {offsets = [0, 4], sizes = [1, 256], strides = [1, 1]} : vector<1x262xf32> to vector<1x256xf32>
    %522 = vector.broadcast %39 : f32 to vector<1x256xf32>
    %523 = arith.mulf %522, %521 : vector<1x256xf32>
    %524 = vector.extract_strided_slice %482 {offsets = [0, 4], sizes = [1, 256], strides = [1, 1]} : vector<1x262xf32> to vector<1x256xf32>
    %525 = vector.broadcast %88 : f32 to vector<1x256xf32>
    %526 = arith.mulf %525, %524 : vector<1x256xf32>
    %527 = arith.addf %523, %526 : vector<1x256xf32>
    %c4_123 = arith.constant 4 : index
    %c0_124 = arith.constant 0 : index
    %528 = vector.load %arg4[%c4_123, %c0_124] : memref<7x256xf32, #tpu.memory_space<vmem>>, vector<1x256xf32>
    %529 = arith.mulf %527, %528 : vector<1x256xf32>
    %530 = arith.addf %492, %529 : vector<1x256xf32>
    %531 = vector.extract_strided_slice %481 {offsets = [0, 5], sizes = [1, 256], strides = [1, 1]} : vector<1x262xf32> to vector<1x256xf32>
    %532 = vector.broadcast %40 : f32 to vector<1x256xf32>
    %533 = arith.mulf %532, %531 : vector<1x256xf32>
    %534 = vector.extract_strided_slice %482 {offsets = [0, 5], sizes = [1, 256], strides = [1, 1]} : vector<1x262xf32> to vector<1x256xf32>
    %535 = vector.broadcast %89 : f32 to vector<1x256xf32>
    %536 = arith.mulf %535, %534 : vector<1x256xf32>
    %537 = arith.addf %533, %536 : vector<1x256xf32>
    %c5_125 = arith.constant 5 : index
    %c0_126 = arith.constant 0 : index
    %538 = vector.load %arg4[%c5_125, %c0_126] : memref<7x256xf32, #tpu.memory_space<vmem>>, vector<1x256xf32>
    %539 = arith.mulf %537, %538 : vector<1x256xf32>
    %540 = arith.addf %502, %539 : vector<1x256xf32>
    %541 = vector.extract_strided_slice %481 {offsets = [0, 6], sizes = [1, 256], strides = [1, 1]} : vector<1x262xf32> to vector<1x256xf32>
    %542 = vector.broadcast %41 : f32 to vector<1x256xf32>
    %543 = arith.mulf %542, %541 : vector<1x256xf32>
    %544 = vector.extract_strided_slice %482 {offsets = [0, 6], sizes = [1, 256], strides = [1, 1]} : vector<1x262xf32> to vector<1x256xf32>
    %545 = vector.broadcast %90 : f32 to vector<1x256xf32>
    %546 = arith.mulf %545, %544 : vector<1x256xf32>
    %547 = arith.addf %543, %546 : vector<1x256xf32>
    %c6_127 = arith.constant 6 : index
    %c0_128 = arith.constant 0 : index
    %548 = vector.load %arg4[%c6_127, %c0_128] : memref<7x256xf32, #tpu.memory_space<vmem>>, vector<1x256xf32>
    %549 = arith.mulf %547, %548 : vector<1x256xf32>
    %550 = arith.addf %512, %549 : vector<1x256xf32>
    %c0_129 = arith.constant 0 : index
    %c96_130 = arith.constant 96 : index
    %551 = vector.load %arg7[%c0_129, %c96_130] : memref<2x358xf32, #tpu.memory_space<vmem>>, vector<1x262xf32>
    %c1_131 = arith.constant 1 : index
    %c96_132 = arith.constant 96 : index
    %552 = vector.load %arg7[%c1_131, %c96_132] : memref<2x358xf32, #tpu.memory_space<vmem>>, vector<1x262xf32>
    %553 = vector.extract_strided_slice %551 {offsets = [0, 0], sizes = [1, 256], strides = [1, 1]} : vector<1x262xf32> to vector<1x256xf32>
    %554 = vector.broadcast %42 : f32 to vector<1x256xf32>
    %555 = arith.mulf %554, %553 : vector<1x256xf32>
    %556 = vector.extract_strided_slice %552 {offsets = [0, 0], sizes = [1, 256], strides = [1, 1]} : vector<1x262xf32> to vector<1x256xf32>
    %557 = vector.broadcast %91 : f32 to vector<1x256xf32>
    %558 = arith.mulf %557, %556 : vector<1x256xf32>
    %559 = arith.addf %555, %558 : vector<1x256xf32>
    %c0_133 = arith.constant 0 : index
    %c0_134 = arith.constant 0 : index
    %560 = vector.load %arg4[%c0_133, %c0_134] : memref<7x256xf32, #tpu.memory_space<vmem>>, vector<1x256xf32>
    %561 = arith.mulf %559, %560 : vector<1x256xf32>
    %562 = arith.addf %520, %561 : vector<1x256xf32>
    %563 = vector.extract_strided_slice %551 {offsets = [0, 1], sizes = [1, 256], strides = [1, 1]} : vector<1x262xf32> to vector<1x256xf32>
    %564 = vector.broadcast %43 : f32 to vector<1x256xf32>
    %565 = arith.mulf %564, %563 : vector<1x256xf32>
    %566 = vector.extract_strided_slice %552 {offsets = [0, 1], sizes = [1, 256], strides = [1, 1]} : vector<1x262xf32> to vector<1x256xf32>
    %567 = vector.broadcast %92 : f32 to vector<1x256xf32>
    %568 = arith.mulf %567, %566 : vector<1x256xf32>
    %569 = arith.addf %565, %568 : vector<1x256xf32>
    %c1_135 = arith.constant 1 : index
    %c0_136 = arith.constant 0 : index
    %570 = vector.load %arg4[%c1_135, %c0_136] : memref<7x256xf32, #tpu.memory_space<vmem>>, vector<1x256xf32>
    %571 = arith.mulf %569, %570 : vector<1x256xf32>
    %572 = arith.addf %530, %571 : vector<1x256xf32>
    %573 = vector.extract_strided_slice %551 {offsets = [0, 2], sizes = [1, 256], strides = [1, 1]} : vector<1x262xf32> to vector<1x256xf32>
    %574 = vector.broadcast %44 : f32 to vector<1x256xf32>
    %575 = arith.mulf %574, %573 : vector<1x256xf32>
    %576 = vector.extract_strided_slice %552 {offsets = [0, 2], sizes = [1, 256], strides = [1, 1]} : vector<1x262xf32> to vector<1x256xf32>
    %577 = vector.broadcast %93 : f32 to vector<1x256xf32>
    %578 = arith.mulf %577, %576 : vector<1x256xf32>
    %579 = arith.addf %575, %578 : vector<1x256xf32>
    %c2_137 = arith.constant 2 : index
    %c0_138 = arith.constant 0 : index
    %580 = vector.load %arg4[%c2_137, %c0_138] : memref<7x256xf32, #tpu.memory_space<vmem>>, vector<1x256xf32>
    %581 = arith.mulf %579, %580 : vector<1x256xf32>
    %582 = arith.addf %540, %581 : vector<1x256xf32>
    %583 = vector.extract_strided_slice %551 {offsets = [0, 3], sizes = [1, 256], strides = [1, 1]} : vector<1x262xf32> to vector<1x256xf32>
    %584 = vector.broadcast %45 : f32 to vector<1x256xf32>
    %585 = arith.mulf %584, %583 : vector<1x256xf32>
    %586 = vector.extract_strided_slice %552 {offsets = [0, 3], sizes = [1, 256], strides = [1, 1]} : vector<1x262xf32> to vector<1x256xf32>
    %587 = vector.broadcast %94 : f32 to vector<1x256xf32>
    %588 = arith.mulf %587, %586 : vector<1x256xf32>
    %589 = arith.addf %585, %588 : vector<1x256xf32>
    %590 = arith.addf %550, %589 : vector<1x256xf32>
    %591 = vector.extract_strided_slice %551 {offsets = [0, 4], sizes = [1, 256], strides = [1, 1]} : vector<1x262xf32> to vector<1x256xf32>
    %592 = vector.broadcast %46 : f32 to vector<1x256xf32>
    %593 = arith.mulf %592, %591 : vector<1x256xf32>
    %594 = vector.extract_strided_slice %552 {offsets = [0, 4], sizes = [1, 256], strides = [1, 1]} : vector<1x262xf32> to vector<1x256xf32>
    %595 = vector.broadcast %95 : f32 to vector<1x256xf32>
    %596 = arith.mulf %595, %594 : vector<1x256xf32>
    %597 = arith.addf %593, %596 : vector<1x256xf32>
    %c4_139 = arith.constant 4 : index
    %c0_140 = arith.constant 0 : index
    %598 = vector.load %arg4[%c4_139, %c0_140] : memref<7x256xf32, #tpu.memory_space<vmem>>, vector<1x256xf32>
    %599 = arith.mulf %597, %598 : vector<1x256xf32>
    %600 = arith.addf %562, %599 : vector<1x256xf32>
    %601 = vector.extract_strided_slice %551 {offsets = [0, 5], sizes = [1, 256], strides = [1, 1]} : vector<1x262xf32> to vector<1x256xf32>
    %602 = vector.broadcast %47 : f32 to vector<1x256xf32>
    %603 = arith.mulf %602, %601 : vector<1x256xf32>
    %604 = vector.extract_strided_slice %552 {offsets = [0, 5], sizes = [1, 256], strides = [1, 1]} : vector<1x262xf32> to vector<1x256xf32>
    %605 = vector.broadcast %96 : f32 to vector<1x256xf32>
    %606 = arith.mulf %605, %604 : vector<1x256xf32>
    %607 = arith.addf %603, %606 : vector<1x256xf32>
    %c5_141 = arith.constant 5 : index
    %c0_142 = arith.constant 0 : index
    %608 = vector.load %arg4[%c5_141, %c0_142] : memref<7x256xf32, #tpu.memory_space<vmem>>, vector<1x256xf32>
    %609 = arith.mulf %607, %608 : vector<1x256xf32>
    %610 = arith.addf %572, %609 : vector<1x256xf32>
    %611 = vector.extract_strided_slice %551 {offsets = [0, 6], sizes = [1, 256], strides = [1, 1]} : vector<1x262xf32> to vector<1x256xf32>
    %612 = vector.broadcast %48 : f32 to vector<1x256xf32>
    %613 = arith.mulf %612, %611 : vector<1x256xf32>
    %614 = vector.extract_strided_slice %552 {offsets = [0, 6], sizes = [1, 256], strides = [1, 1]} : vector<1x262xf32> to vector<1x256xf32>
    %615 = vector.broadcast %97 : f32 to vector<1x256xf32>
    %616 = arith.mulf %615, %614 : vector<1x256xf32>
    %617 = arith.addf %613, %616 : vector<1x256xf32>
    %c6_143 = arith.constant 6 : index
    %c0_144 = arith.constant 0 : index
    %618 = vector.load %arg4[%c6_143, %c0_144] : memref<7x256xf32, #tpu.memory_space<vmem>>, vector<1x256xf32>
    %619 = arith.mulf %617, %618 : vector<1x256xf32>
    %620 = arith.addf %582, %619 : vector<1x256xf32>
    %621 = arith.addf %620, %590 : vector<1x256xf32>
    %622 = arith.addf %600, %610 : vector<1x256xf32>
    %623 = arith.addf %621, %622 : vector<1x256xf32>
    %624 = arith.negf %623 : vector<1x256xf32>
    %625 = math.exp %624 : vector<1x256xf32>
    %cst_145 = arith.constant 1.000000e+00 : f32
    %626 = vector.broadcast %cst_145 : f32 to vector<1x256xf32>
    %627 = arith.addf %626, %625 : vector<1x256xf32>
    %628 = arith.divf %626, %627 : vector<1x256xf32>
    %c0_146 = arith.constant 0 : index
    %c0_147 = arith.constant 0 : index
    %c0_148 = arith.constant 0 : index
    %629 = vector.load %arg6[%c0_146, %c0_147, %c0_148] : memref<1x32x256xf32, #tpu.memory_space<vmem>>, vector<1x32x256xf32>
    %630 = vector.shape_cast %628 : vector<1x256xf32> to vector<1x1x256xf32>
    %631 = vector.broadcast %630 : vector<1x1x256xf32> to vector<1x32x256xf32>
    %632 = arith.mulf %629, %631 : vector<1x32x256xf32>
    %c0_149 = arith.constant 0 : index
    %c0_150 = arith.constant 0 : index
    %c0_151 = arith.constant 0 : index
    %633 = vector.load %arg6[%c0_149, %c0_150, %c0_151] : memref<1x32x256xf32, #tpu.memory_space<vmem>>, vector<1x32x256xf32>
    tpu.vector_store %arg6[%c0_149, %c0_150, %c0_151], %632 {strides = array<i32>} : memref<1x32x256xf32, #tpu.memory_space<vmem>>, vector<1x32x256xf32>,
    return
  }
  func.func @transform_0(%arg0: i32) -> (i32, i32, i32) {
    %c0_i32 = arith.constant 0 : i32
    %c0_i32_0 = arith.constant 0 : i32
    %c0_i32_1 = arith.constant 0 : i32
    return %arg0, %c0_i32, %c0_i32_0 : i32, i32, i32
  }
  func.func @transform_1(%arg0: i32) -> (i32, i32) {
    %c0_i32 = arith.constant 0 : i32
    %c0_i32_0 = arith.constant 0 : i32
    %c0_i32_1 = arith.constant 0 : i32
    return %c0_i32, %c0_i32_0 : i32, i32
  }
  func.func @transform_2(%arg0: i32) -> (i32, i32) {
    %c0_i32 = arith.constant 0 : i32
    %c0_i32_0 = arith.constant 0 : i32
    %c0_i32_1 = arith.constant 0 : i32
    return %c0_i32, %c0_i32_0 : i32, i32
  }
  func.func @transform_3(%arg0: i32) -> (i32, i32) {
    %c0_i32 = arith.constant 0 : i32
    %c0_i32_0 = arith.constant 0 : i32
    %c0_i32_1 = arith.constant 0 : i32
    return %c0_i32, %c0_i32_0 : i32, i32
  }
  func.func @transform_4(%arg0: i32) -> i32 {
    %c0_i32 = arith.constant 0 : i32
    %c0_i32_0 = arith.constant 0 : i32
    return %c0_i32 : i32
  }
  func.func @transform_5(%arg0: i32) -> (i32, i32, i32) {
    %c0_i32 = arith.constant 0 : i32
    %c0_i32_0 = arith.constant 0 : i32
    %c0_i32_1 = arith.constant 0 : i32
    return %arg0, %c0_i32, %c0_i32_0 : i32, i32, i32
  }
}

</mosaic_0001>

<llo_original>
// kernel: tpu_custom_call.1
$region0: #{tpu_custom_call.1}
  #allocation0 [shape = 'u32[]', space=smem, size = 0x4, offset = 0x4, fixed_abs, tag = 'smem constant byte address 0x4 - core index']
  #allocation1 [shape = 'u32[144,128]{1,0:T(1,128)}', space=vmem, size = 0x12000, scoped, tag = 'internal scratch']
  #allocation2 [shape = 'f32[2,358]{1,0:T(2,128)}', space=vmem, size = 0xc00, scoped, tag = 'scratch operand']
  %s0 = inlined_call_operand.hbm [shape: f32[2,32,256], index: 0, kind: input, shape index: {}]
  %s1 = inlined_call_operand.vmem [shape: f32[32,2], index: 1, kind: input, shape index: {}]
  %s2 = inlined_call_operand.vmem [shape: f32[2,32], index: 2, kind: input, shape index: {}]
  %s3 = inlined_call_operand.vmem [shape: f32[7,256], index: 3, kind: input, shape index: {}]
  %s4 = inlined_call_operand.vmem [shape: f32[98], index: 4, kind: input, shape index: {}]
  %s5 = inlined_call_operand.hbm [shape: f32[2,32,256], index: 5, kind: output, shape index: {}]
  %s6 = sld [smem:[#allocation0]]
  $region61: #{tpu_custom_call.1} parent=0
    _
  %s8 = ssub.s32 1, %s6
  %s9 = scalar_select 0, %s8, %s6
  $region1: #{tpu_custom_call.1} parent=0
    #allocation3 [shape = 'u8[65536]{0}', space=vmem, size = 0x10000, scoped, tag = 'input window, operand 0']
    #allocation4 [shape = 's32[2]{0}', space=sflag, size = 0x8, scoped, tag = 'scoped memory for tpu_custom_call.1']
    #allocation5 [shape = 's32[2]{0}', space=sflag, size = 0x8, scoped, tag = 'scoped memory for tpu_custom_call.1']
    #allocation6 [shape = 's32[2]{0}', space=sflag, size = 0x8, scoped, tag = 'scoped memory for tpu_custom_call.1']
    #allocation7 [shape = 'u8[512]{0}', space=smem, size = 0x200, scoped, tag = 'input window, operand 4, single buffered']
    #allocation8 [shape = 'u8[65536]{0}', space=vmem, size = 0x10000, scoped, tag = 'output window, operand 0']
    %10 = vsyncpa [#allocation4], 0
    %s11 = scalar_lea.sflag [#allocation4], 1
    %12 = vsyncpa %s11, 0
    %13 = vsyncpa [#allocation6], 0
    %14 = vsyncpa [#allocation5], 0
    %s15 = scalar_lea.sflag [#allocation5], 1
    %16 = vsyncpa %s15, 0
    loop: start=0, step=1, limit=4
    $region2: #{tpu_custom_call.1} parent=1 // loop_pre_header
      _
    $region3: #{tpu_custom_call.1} parent=1 // loop_header
      %s18 = sphi 0, %s22
      %p19 = scmp.ge.s32.totalorder %s18, 4
      %s28 = sphi 0, %s30
      %s31 = sphi 0, %s28
      %s32 = sphi 0, %s31
      %s48 = sphi 0, %s32
      %s52 = sphi 0, %s52
      %s54 = sphi 0, %s52
      %s55 = sphi 0, %s54
      %s69 = sphi 0, %s55
      %s73 = sphi 0, %s73
      %s75 = sphi 0, %s73
      %s76 = sphi 0, %s75
      %s90 = sphi 0, %s76
      %s94 = sphi 0, %s94
      %s96 = sphi 0, %s94
      %s97 = sphi 0, %s96
      %s111 = sphi 0, %s97
      %s115 = sphi 0, %s115
      %s117 = sphi 0, %s115
      %s118 = sphi 0, %s117
      %s132 = sphi 0, %s118
      %s138 = sphi 0, %s140
      %s141 = sphi 0, %s138
      %s142 = sphi 0, %s141
      %s158 = sphi 0, %s142
    $region4: #{tpu_custom_call.1} parent=1 // loop_header_branch
      %21 = sbr.rel (%p19) target = $region8
    $region5: #{tpu_custom_call.1} parent=1 // loop_body
      %s23 = ssub.s32 %s18, 1
      %s24 = ssub.s32 %s18, 2
      %s25 = sadd.s32 %s18, 1
      %s26 = ssub.s32 %s18, %s25
      %p27 = scmp.eq.s32.totalorder %s26, 0
      %s29 = sadd.s32 %s28, 1
      %s30 = scalar_select %p27, %s28, %s29
      %p33 = pneg %p27
      %p34 = scmp.eq.s32.totalorder %s18, 1
      %p35 = por %p33, %p34
      %p36 = scmp.ne.s32.totalorder %s28, %s31
      %p37 = scmp.eq.s32.totalorder %s18, 0
      %p38 = por %p36, %p37
      %p39 = scmp.ne.s32.totalorder %s28, %s31
      %p40 = scmp.eq.s32.totalorder %s23, 1
      %p41 = por %p39, %p40
      %p42 = scmp.ne.s32.totalorder %s31, %s32
      %p43 = scmp.eq.s32.totalorder %s23, 0
      %p44 = por %p42, %p43
      %p45 = scmp.ne.s32.totalorder %s31, %s32
      %p46 = scmp.eq.s32.totalorder %s24, 1
      %p47 = por %p45, %p46
      %p49 = scmp.ne.s32.totalorder %s32, %s48
      %p50 = scmp.eq.s32.totalorder %s24, 0
      %p51 = por %p49, %p50
      %s53 = sadd.s32 %s52, 1
      %p56 = scmp.eq.s32.totalorder %s18, 1
      %p57 = scmp.ne.s32.totalorder %s52, %s54
      %p58 = scmp.eq.s32.totalorder %s18, 0
      %p59 = por %p57, %p58
      %p60 = scmp.ne.s32.totalorder %s52, %s54
      %p61 = scmp.eq.s32.totalorder %s23, 1
      %p62 = por %p60, %p61
      %p63 = scmp.ne.s32.totalorder %s54, %s55
      %p64 = scmp.eq.s32.totalorder %s23, 0
      %p65 = por %p63, %p64
      %p66 = scmp.ne.s32.totalorder %s54, %s55
      %p67 = scmp.eq.s32.totalorder %s24, 1
      %p68 = por %p66, %p67
      %p70 = scmp.ne.s32.totalorder %s55, %s69
      %p71 = scmp.eq.s32.totalorder %s24, 0
      %p72 = por %p70, %p71
      %s74 = sadd.s32 %s73, 1
      %p77 = scmp.eq.s32.totalorder %s18, 1
      %p78 = scmp.ne.s32.totalorder %s73, %s75
      %p79 = scmp.eq.s32.totalorder %s18, 0
      %p80 = por %p78, %p79
      %p81 = scmp.ne.s32.totalorder %s73, %s75
      %p82 = scmp.eq.s32.totalorder %s23, 1
      %p83 = por %p81, %p82
      %p84 = scmp.ne.s32.totalorder %s75, %s76
      %p85 = scmp.eq.s32.totalorder %s23, 0
      %p86 = por %p84, %p85
      %p87 = scmp.ne.s32.totalorder %s75, %s76
      %p88 = scmp.eq.s32.totalorder %s24, 1
      %p89 = por %p87, %p88
      %p91 = scmp.ne.s32.totalorder %s76, %s90
      %p92 = scmp.eq.s32.totalorder %s24, 0
      %p93 = por %p91, %p92
      %s95 = sadd.s32 %s94, 1
      %p98 = scmp.eq.s32.totalorder %s18, 1
      %p99 = scmp.ne.s32.totalorder %s94, %s96
      %p100 = scmp.eq.s32.totalorder %s18, 0
      %p101 = por %p99, %p100
      %p102 = scmp.ne.s32.totalorder %s94, %s96
      %p103 = scmp.eq.s32.totalorder %s23, 1
      %p104 = por %p102, %p103
      %p105 = scmp.ne.s32.totalorder %s96, %s97
      %p106 = scmp.eq.s32.totalorder %s23, 0
      %p107 = por %p105, %p106
      %p108 = scmp.ne.s32.totalorder %s96, %s97
      %p109 = scmp.eq.s32.totalorder %s24, 1
      %p110 = por %p108, %p109
      %p112 = scmp.ne.s32.totalorder %s97, %s111
      %p113 = scmp.eq.s32.totalorder %s24, 0
      %p114 = por %p112, %p113
      %s116 = sadd.s32 %s115, 1
      %p119 = scmp.eq.s32.totalorder %s18, 1
      %p120 = scmp.ne.s32.totalorder %s115, %s117
      %p121 = scmp.eq.s32.totalorder %s18, 0
      %p122 = por %p120, %p121
      %p123 = scmp.ne.s32.totalorder %s115, %s117
      %p124 = scmp.eq.s32.totalorder %s23, 1
      %p125 = por %p123, %p124
      %p126 = scmp.ne.s32.totalorder %s117, %s118
      %p127 = scmp.eq.s32.totalorder %s23, 0
      %p128 = por %p126, %p127
      %p129 = scmp.ne.s32.totalorder %s117, %s118
      %p130 = scmp.eq.s32.totalorder %s24, 1
      %p131 = por %p129, %p130
      %p133 = scmp.ne.s32.totalorder %s118, %s132
      %p134 = scmp.eq.s32.totalorder %s24, 0
      %p135 = por %p133, %p134
      %s136 = ssub.s32 %s18, %s25
      %p137 = scmp.eq.s32.totalorder %s136, 0
      %s139 = sadd.s32 %s138, 1
      %s140 = scalar_select %p137, %s138, %s139
      %p143 = pneg %p137
      %p144 = scmp.eq.s32.totalorder %s18, 1
      %p145 = por %p143, %p144
      %p146 = scmp.ne.s32.totalorder %s138, %s141
      %p147 = scmp.eq.s32.totalorder %s18, 0
      %p148 = por %p146, %p147
      %p149 = scmp.ne.s32.totalorder %s138, %s141
      %p150 = scmp.eq.s32.totalorder %s23, 1
      %p151 = por %p149, %p150
      %p152 = scmp.ne.s32.totalorder %s141, %s142
      %p153 = scmp.eq.s32.totalorder %s23, 0
      %p154 = por %p152, %p153
      %p155 = scmp.ne.s32.totalorder %s141, %s142
      %p156 = scmp.eq.s32.totalorder %s24, 1
      %p157 = por %p155, %p156
      %p159 = scmp.ne.s32.totalorder %s142, %s158
      %p160 = scmp.eq.s32.totalorder %s24, 0
      %p161 = por %p159, %p160
      %p162 = scmp.le.s32.totalorder 1, %s18
      %p163 = scmp.lt.s32.totalorder %s18, 3
      %p164 = pnand %p162, %p163
      %p165 = pneg %p164
      // Predicated region
      $region9: #{tpu_custom_call.1} parent=5 // pred_check
        _
      $region10: #{tpu_custom_call.1} parent=5 // pred_check_branch
        %167 = sbr.rel (%p164) target = $region12
      $region11: #{tpu_custom_call.1} parent=5 // pred_region
        %s168 = ssub.s32 %s18, 1
        // Predicated region
        $region13: #{tpu_custom_call.1} parent=11 // pred_check
          %p169 = pneg %p65
        $region14: #{tpu_custom_call.1} parent=11 // pred_check_branch
          %171 = sbr.rel (%p169) target = $region16
        $region15: #{tpu_custom_call.1} parent=11 // pred_region
          _
        $region16: #{tpu_custom_call.1} parent=11 // pred_fallthru
          _
        // Predicated region
        $region17: #{tpu_custom_call.1} parent=11 // pred_check
          %p172 = pneg %p86
        $region18: #{tpu_custom_call.1} parent=11 // pred_check_branch
          %174 = sbr.rel (%p172) target = $region20
        $region19: #{tpu_custom_call.1} parent=11 // pred_region
          _
        $region20: #{tpu_custom_call.1} parent=11 // pred_fallthru
          _
        // Predicated region
        $region21: #{tpu_custom_call.1} parent=11 // pred_check
          %p175 = pneg %p107
        $region22: #{tpu_custom_call.1} parent=11 // pred_check_branch
          %177 = sbr.rel (%p175) target = $region24
        $region23: #{tpu_custom_call.1} parent=11 // pred_region
          _
        $region24: #{tpu_custom_call.1} parent=11 // pred_fallthru
          _
        // Predicated region
        $region25: #{tpu_custom_call.1} parent=11 // pred_check
          %p178 = pneg %p128
        $region26: #{tpu_custom_call.1} parent=11 // pred_check_branch
          %180 = sbr.rel (%p178) target = $region28
        $region27: #{tpu_custom_call.1} parent=11 // pred_region
          %s182 = ssub.s32 16, 16
          %183 = vsyncadd [#allocation6], %s182
          %s185 = sshll.u32 %s4, 4
          %s186 = int_to_ptr.vmem [resolvable:$true] %s185
          %188 = dma.vmem_to_smem %s186, 16, [#allocation7], [#allocation6]
        $region28: #{tpu_custom_call.1} parent=11 // pred_fallthru
          _
      $region12: #{tpu_custom_call.1} parent=5 // pred_fallthru
        _
      %p189 = scmp.lt.s32.totalorder %s18, 2
      // Predicated region
      $region29: #{tpu_custom_call.1} parent=5 // pred_check
        %p190 = pneg %p189
      $region30: #{tpu_custom_call.1} parent=5 // pred_check_branch
        %192 = sbr.rel (%p190) target = $region32
      $region31: #{tpu_custom_call.1} parent=5 // pred_region
        // Predicated region
        $region33: #{tpu_custom_call.1} parent=31 // pred_check
          %p193 = pneg %p38
        $region34: #{tpu_custom_call.1} parent=31 // pred_check_branch
          %195 = sbr.rel (%p193) target = $region36
        $region35: #{tpu_custom_call.1} parent=31 // pred_region
          %s196 = sand.u32 %s28, 1
          %s197 = scalar_lea.sflag [#allocation4], %s196
          %s198 = sand.u32 %s28, 1
          %s199 = smul.addr %s198, 64
          %s200 = scalar_lea.vmem [#allocation3], %s199
          %s202 = ssub.s32 1024, 1024
          %203 = vsyncadd %s197, %s202
          %s204 = smul.addr %s18, 8
          %s205 = smul.addr %s204, 128
          %s206 = scalar_lea.hbm %s0, %s205
          %s207 = sshll.u32 %s200, 4
          %s208 = int_to_ptr.vmem [resolvable:$true] %s207
          %213 = dma.hbm_to_vmem [thread:$0]  %s206, 1024, %s208, %s197, 256, 256, 16
        $region36: #{tpu_custom_call.1} parent=31 // pred_fallthru
          _
      $region32: #{tpu_custom_call.1} parent=5 // pred_fallthru
        _
      %p214 = scmp.le.s32.totalorder 1, %s18
      %p215 = scmp.lt.s32.totalorder %s18, 3
      %p216 = pnand %p214, %p215
      %p217 = pneg %p216
      // Predicated region
      $region37: #{tpu_custom_call.1} parent=5 // pred_check
        _
      $region38: #{tpu_custom_call.1} parent=5 // pred_check_branch
        %219 = sbr.rel (%p216) target = $region40
      $region39: #{tpu_custom_call.1} parent=5 // pred_region
        %s220 = ssub.s32 %s18, 1
        %s221 = sand.u32 %s31, 1
        %s222 = scalar_lea.sflag [#allocation4], %s221
        %s223 = sand.u32 %s31, 1
        %s224 = smul.addr %s223, 64
        %s225 = scalar_lea.vmem [#allocation3], %s224
        // Predicated region
        $region41: #{tpu_custom_call.1} parent=39 // pred_check
          %p226 = pneg %p44
        $region42: #{tpu_custom_call.1} parent=39 // pred_check_branch
          %228 = sbr.rel (%p226) target = $region44
        $region43: #{tpu_custom_call.1} parent=39 // pred_region
          %229 = dma.done %s222, 1024
        $region44: #{tpu_custom_call.1} parent=39 // pred_fallthru
          _
        // Predicated region
        $region45: #{tpu_custom_call.1} parent=39 // pred_check
          %p230 = pneg %p128
        $region46: #{tpu_custom_call.1} parent=39 // pred_check_branch
          %232 = sbr.rel (%p230) target = $region48
        $region47: #{tpu_custom_call.1} parent=39 // pred_region
          %233 = dma.done [#allocation6], 16
        $region48: #{tpu_custom_call.1} parent=39 // pred_fallthru
          _
        %234 = sfence
        %s235 = sand.u32 %s31, 1
        %s236 = scalar_lea.sflag [#allocation4], %s235
        %s237 = sand.u32 %s31, 1
        %s238 = smul.addr %s237, 64
        %s239 = scalar_lea.vmem [#allocation3], %s238
        %p240 = pneg %p44
        %p241 = pneg %p41
        %p242 = pneg %p65
        %p243 = pneg %p62
        %p244 = pneg %p86
        %p245 = pneg %p83
        %p246 = pneg %p107
        %p247 = pneg %p104
        %p248 = pneg %p128
        %p249 = pneg %p125
        %p250 = pneg %p154
        %p251 = pneg %p151
        %s252 = sand.u32 %s141, 1
        %s253 = scalar_lea.sflag [#allocation5], %s252
        %s254 = sand.u32 %s141, 1
        %s255 = smul.addr %s254, 64
        %s256 = scalar_lea.vmem [#allocation8], %s255
        %s257 = sld [smem:[#allocation7]]
        %s258 = sld [smem:[#allocation7 + $0x1]]
        %s259 = sld [smem:[#allocation7 + $0x2]]
        %s260 = sld [smem:[#allocation7 + $0x3]]
        %s261 = sld [smem:[#allocation7 + $0x4]]
        %s262 = sld [smem:[#allocation7 + $0x5]]
        %s263 = sld [smem:[#allocation7 + $0x6]]
        %s264 = sld [smem:[#allocation7 + $0x7]]
        %s265 = sld [smem:[#allocation7 + $0x8]]
        %s266 = sld [smem:[#allocation7 + $0x9]]
        %s267 = sld [smem:[#allocation7 + $0xa]]
        %s268 = sld [smem:[#allocation7 + $0xb]]
        %s269 = sld [smem:[#allocation7 + $0xc]]
        %s270 = sld [smem:[#allocation7 + $0xd]]
        %s271 = sld [smem:[#allocation7 + $0xe]]
        %s272 = sld [smem:[#allocation7 + $0xf]]
        %s273 = sld [smem:[#allocation7 + $0x10]]
        %s274 = sld [smem:[#allocation7 + $0x11]]
        %s275 = sld [smem:[#allocation7 + $0x12]]
        %s276 = sld [smem:[#allocation7 + $0x13]]
        %s277 = sld [smem:[#allocation7 + $0x14]]
        %s278 = sld [smem:[#allocation7 + $0x15]]
        %s279 = sld [smem:[#allocation7 + $0x16]]
        %s280 = sld [smem:[#allocation7 + $0x17]]
        %s281 = sld [smem:[#allocation7 + $0x18]]
        %s282 = sld [smem:[#allocation7 + $0x19]]
        %s283 = sld [smem:[#allocation7 + $0x1a]]
        %s284 = sld [smem:[#allocation7 + $0x1b]]
        %s285 = sld [smem:[#allocation7 + $0x1c]]
        %s286 = sld [smem:[#allocation7 + $0x1d]]
        %s287 = sld [smem:[#allocation7 + $0x1e]]
        %s288 = sld [smem:[#allocation7 + $0x1f]]
        %s289 = sld [smem:[#allocation7 + $0x20]]
        %s290 = sld [smem:[#allocation7 + $0x21]]
        %s291 = sld [smem:[#allocation7 + $0x22]]
        %s292 = sld [smem:[#allocation7 + $0x23]]
        %s293 = sld [smem:[#allocation7 + $0x24]]
        %s294 = sld [smem:[#allocation7 + $0x25]]
        %s295 = sld [smem:[#allocation7 + $0x26]]
        %s296 = sld [smem:[#allocation7 + $0x27]]
        %s297 = sld [smem:[#allocation7 + $0x28]]
        %s298 = sld [smem:[#allocation7 + $0x29]]
        %s299 = sld [smem:[#allocation7 + $0x2a]]
        %s300 = sld [smem:[#allocation7 + $0x2b]]
        %s301 = sld [smem:[#allocation7 + $0x2c]]
        %s302 = sld [smem:[#allocation7 + $0x2d]]
        %s303 = sld [smem:[#allocation7 + $0x2e]]
        %s304 = sld [smem:[#allocation7 + $0x2f]]
        %s305 = sld [smem:[#allocation7 + $0x30]]
        %s306 = sld [smem:[#allocation7 + $0x31]]
        %s307 = sld [smem:[#allocation7 + $0x32]]
        %s308 = sld [smem:[#allocation7 + $0x33]]
        %s309 = sld [smem:[#allocation7 + $0x34]]
        %s310 = sld [smem:[#allocation7 + $0x35]]
        %s311 = sld [smem:[#allocation7 + $0x36]]
        %s312 = sld [smem:[#allocation7 + $0x37]]
        %s313 = sld [smem:[#allocation7 + $0x38]]
        %s314 = sld [smem:[#allocation7 + $0x39]]
        %s315 = sld [smem:[#allocation7 + $0x3a]]
        %s316 = sld [smem:[#allocation7 + $0x3b]]
        %s317 = sld [smem:[#allocation7 + $0x3c]]
        %s318 = sld [smem:[#allocation7 + $0x3d]]
        %s319 = sld [smem:[#allocation7 + $0x3e]]
        %s320 = sld [smem:[#allocation7 + $0x3f]]
        %s321 = sld [smem:[#allocation7 + $0x40]]
        %s322 = sld [smem:[#allocation7 + $0x41]]
        %s323 = sld [smem:[#allocation7 + $0x42]]
        %s324 = sld [smem:[#allocation7 + $0x43]]
        %s325 = sld [smem:[#allocation7 + $0x44]]
        %s326 = sld [smem:[#allocation7 + $0x45]]
        %s327 = sld [smem:[#allocation7 + $0x46]]
        %s328 = sld [smem:[#allocation7 + $0x47]]
        %s329 = sld [smem:[#allocation7 + $0x48]]
        %s330 = sld [smem:[#allocation7 + $0x49]]
        %s331 = sld [smem:[#allocation7 + $0x4a]]
        %s332 = sld [smem:[#allocation7 + $0x4b]]
        %s333 = sld [smem:[#allocation7 + $0x4c]]
        %s334 = sld [smem:[#allocation7 + $0x4d]]
        %s335 = sld [smem:[#allocation7 + $0x4e]]
        %s336 = sld [smem:[#allocation7 + $0x4f]]
        %s337 = sld [smem:[#allocation7 + $0x50]]
        %s338 = sld [smem:[#allocation7 + $0x51]]
        %s339 = sld [smem:[#allocation7 + $0x52]]
        %s340 = sld [smem:[#allocation7 + $0x53]]
        %s341 = sld [smem:[#allocation7 + $0x54]]
        %s342 = sld [smem:[#allocation7 + $0x55]]
        %s343 = sld [smem:[#allocation7 + $0x56]]
        %s344 = sld [smem:[#allocation7 + $0x57]]
        %s345 = sld [smem:[#allocation7 + $0x58]]
        %s346 = sld [smem:[#allocation7 + $0x59]]
        %s347 = sld [smem:[#allocation7 + $0x5a]]
        %s348 = sld [smem:[#allocation7 + $0x5b]]
        %s349 = sld [smem:[#allocation7 + $0x5c]]
        %s350 = sld [smem:[#allocation7 + $0x5d]]
        %s351 = sld [smem:[#allocation7 + $0x5e]]
        %s352 = sld [smem:[#allocation7 + $0x5f]]
        %s353 = sld [smem:[#allocation7 + $0x60]]
        %s354 = sld [smem:[#allocation7 + $0x61]]
        %v355 = vld [vmem:[%s225] sm:$0xff]
        %v356 = vld [vmem:[%s225 + $0x8] sm:$0xff]
        %v357 = vld [vmem:[%s225 + $0x10] sm:$0xff]
        %v358 = vld [vmem:[%s225 + $0x18] sm:$0xff]
        %v359 = vld [vmem:[%s225 + $0x20] sm:$0xff]
        %v360 = vld [vmem:[%s225 + $0x28] sm:$0xff]
        %v361 = vld [vmem:[%s225 + $0x30] sm:$0xff]
        %v362 = vld [vmem:[%s225 + $0x38] sm:$0xff]
        %v363 = vadd.f32 %v355, %v356
        %364 = vadd.xlane.f32.xlu0 %v363
        %v365 = vpop.xlane.xlu0 %364
        %v366 = vadd.f32 %v357, %v358
        %367 = vadd.xlane.f32.xlu0 %v366
        %v368 = vpop.xlane.xlu0 %367
        %v369 = vadd.f32 %v359, %v360
        %370 = vadd.xlane.f32.xlu0 %v369
        %v371 = vpop.xlane.xlu0 %370
        %v372 = vadd.f32 %v361, %v362
        %373 = vadd.xlane.f32.xlu0 %v372
        %v374 = vpop.xlane.xlu0 %373
        %v375 = vmul.f32 %v365, 0.00390625
        %v376 = vmul.f32 %v368, 0.00390625
        %v377 = vmul.f32 %v371, 0.00390625
        %v378 = vmul.f32 %v374, 0.00390625
        %v379 = vld [vmem:[%s1] sm:$0xff]
        %v380 = vld [vmem:[%s1 + $0x8] sm:$0xff]
        %v381 = vld [vmem:[%s1 + $0x10] sm:$0xff]
        %v382 = vld [vmem:[%s1 + $0x18] sm:$0xff]
        %v387 = vlaneseq
        %v388 = vand.u32 %v387, 127
        %v389 = vlaneseq
        %v390 = vshrl.u32 %v389, 7
        %v391 = vsub.s32 %v388, %v390
        %v392 = vrot.slane %v375, %v391
        %v393 = vadd.s32 %v388, 4294967288
        %v394 = vlaneseq
        %v395 = vshrl.u32 %v394, 7
        %v396 = vsub.s32 %v393, %v395
        %v397 = vrot.slane %v376, %v396
        %vm398 = vcmask 130112
        %v399 = vsel %vm398, %v397, %v392
        %v400 = vadd.s32 %v388, 4294967280
        %v401 = vlaneseq
        %v402 = vshrl.u32 %v401, 7
        %v403 = vsub.s32 %v400, %v402
        %v404 = vrot.slane %v377, %v403
        %vm405 = vcmask 195712
        %v406 = vsel %vm405, %v404, %v399
        %v407 = vadd.s32 %v388, 4294967272
        %v408 = vlaneseq
        %v409 = vshrl.u32 %v408, 7
        %v410 = vsub.s32 %v407, %v409
        %v411 = vrot.slane %v378, %v410
        %vm412 = vcmask 261312
        %v413 = vsel %vm412, %v411, %v406
        %vm414 = vcmask 261120
        %v415 = vsel %vm414, %v413, 0
        %417 = vmatprep.subr.mxu0 0.0
        %418 = vmatpush1.msra.mxu0 %v379
        %419 = vmatprep.subr.mxu0 0.0
        %420 = vmatpush1.msra.mxu0 %v380
        %421 = vmatprep.subr.mxu0 0.0
        %422 = vmatpush1.msra.mxu0 %v381
        %423 = vmatprep.subr.mxu0 0.0
        %424 = vmatpush1.msra.mxu0 %v382
        %425 = vmatprep.subr.mxu0 0.0
        %426 = vmatpush1.msra.mxu0 0.0
        %427 = vmatprep.subr.mxu0 0.0
        %428 = vmatpush1.msra.mxu0 0.0
        %429 = vmatprep.subr.mxu0 0.0
        %430 = vmatpush1.msra.mxu0 0.0
        %431 = vmatprep.subr.mxu0 0.0
        %432 = vmatpush1.msra.mxu0 0.0
        %433 = vmatprep.subr.mxu0 0.0
        %434 = vmatpush1.msra.mxu0 0.0
        %435 = vmatprep.subr.mxu0 0.0
        %436 = vmatpush1.msra.mxu0 0.0
        %437 = vmatprep.subr.mxu0 0.0
        %438 = vmatpush1.msra.mxu0 0.0
        %439 = vmatprep.subr.mxu0 0.0
        %440 = vmatpush1.msra.mxu0 0.0
        %441 = vmatprep.subr.mxu0 0.0
        %442 = vmatpush1.msra.mxu0 0.0
        %443 = vmatprep.subr.mxu0 0.0
        %444 = vmatpush1.msra.mxu0 0.0
        %445 = vmatprep.subr.mxu0 0.0
        %446 = vmatpush1.msra.mxu0 0.0
        %447 = vmatprep.subr.mxu0 0.0
        %448 = vmatpush1.msra.mxu0 0.0
        %449 = vmatprep.subr.mxu0 0.0
        %450 = vmatpush1.msra.mxu0 0.0
        %451 = vmatprep.subr.mxu0 0.0
        %452 = vmatpush1.msra.mxu0 0.0
        %453 = vmatprep.subr.mxu0 0.0
        %454 = vmatpush1.msra.mxu0 0.0
        %455 = vmatprep.subr.mxu0 0.0
        %456 = vmatpush1.msra.mxu0 0.0
        %457 = vmatprep.subr.mxu0 0.0
        %458 = vmatpush1.msra.mxu0 0.0
        %459 = vmatprep.subr.mxu0 0.0
        %460 = vmatpush1.msra.mxu0 0.0
        %461 = vmatprep.subr.mxu0 0.0
        %462 = vmatpush1.msra.mxu0 0.0
        %463 = vmatprep.subr.mxu0 0.0
        %464 = vmatpush1.msra.mxu0 0.0
        %465 = vmatprep.subr.mxu0 0.0
        %466 = vmatpush1.msra.mxu0 0.0
        %467 = vmatprep.subr.mxu0 0.0
        %468 = vmatpush1.msra.mxu0 0.0
        %469 = vmatprep.subr.mxu0 0.0
        %470 = vmatpush1.msra.mxu0 0.0
        %471 = vmatprep.subr.mxu0 0.0
        %472 = vmatpush1.msra.mxu0 0.0
        %473 = vmatprep.subr.mxu0 0.0
        %474 = vmatpush1.msra.mxu0 0.0
        %475 = vmatprep.subr.mxu0 0.0
        %476 = vmatpush1.msra.mxu0 0.0
        %477 = vmatprep.subr.mxu0 0.0
        %478 = vmatpush1.msra.mxu0 0.0
        %479 = vmatprep.subr.mxu0 0.0
        %480 = vmatpush1.msra.mxu0 0.0
        %481 = vmatprep.mubr.f32.mxu0 0.0
        %482 = vmatmul.mubr.f32.gmra.mrb[0].mxu0 %v415
        %v483 = vpop.f32.mrb[0].mxu0
        %v484 = vadd.f32 0.0, %v483
        %v485 = vpop.f32.mrb[0].mxu0
        %486 = vdwg.mxu0
        %v487 = vmax.f32 %v484, 0.0
        %v488 = vld [vmem:[%s2] sm:$0x3]
        %vm489 = vcmask 15360
        %v491 = vsel %vm489, %v487, 0
        %vm493 = vcmask 1041408
        %v495 = vsel %vm493, %v488, 0
        %497 = vmatprep.subr.mxu0 0.0
        %498 = vmatpush1.msra.mxu0 %v495
        %499 = vmatprep.subr.mxu0 0.0
        %500 = vmatpush1.msra.mxu0 0.0
        %501 = vmatprep.subr.mxu0 0.0
        %502 = vmatpush1.msra.mxu0 0.0
        %503 = vmatprep.subr.mxu0 0.0
        %504 = vmatpush1.msra.mxu0 0.0
        %505 = vmatprep.subr.mxu0 0.0
        %506 = vmatpush1.msra.mxu0 0.0
        %507 = vmatprep.subr.mxu0 0.0
        %508 = vmatpush1.msra.mxu0 0.0
        %509 = vmatprep.subr.mxu0 0.0
        %510 = vmatpush1.msra.mxu0 0.0
        %511 = vmatprep.subr.mxu0 0.0
        %512 = vmatpush1.msra.mxu0 0.0
        %513 = vmatprep.subr.mxu0 0.0
        %514 = vmatpush1.msra.mxu0 0.0
        %515 = vmatprep.subr.mxu0 0.0
        %516 = vmatpush1.msra.mxu0 0.0
        %517 = vmatprep.subr.mxu0 0.0
        %518 = vmatpush1.msra.mxu0 0.0
        %519 = vmatprep.subr.mxu0 0.0
        %520 = vmatpush1.msra.mxu0 0.0
        %521 = vmatprep.subr.mxu0 0.0
        %522 = vmatpush1.msra.mxu0 0.0
        %523 = vmatprep.subr.mxu0 0.0
        %524 = vmatpush1.msra.mxu0 0.0
        %525 = vmatprep.subr.mxu0 0.0
        %526 = vmatpush1.msra.mxu0 0.0
        %527 = vmatprep.subr.mxu0 0.0
        %528 = vmatpush1.msra.mxu0 0.0
        %529 = vmatprep.subr.mxu0 0.0
        %530 = vmatpush1.msra.mxu0 0.0
        %531 = vmatprep.subr.mxu0 0.0
        %532 = vmatpush1.msra.mxu0 0.0
        %533 = vmatprep.subr.mxu0 0.0
        %534 = vmatpush1.msra.mxu0 0.0
        %535 = vmatprep.subr.mxu0 0.0
        %536 = vmatpush1.msra.mxu0 0.0
        %537 = vmatprep.subr.mxu0 0.0
        %538 = vmatpush1.msra.mxu0 0.0
        %539 = vmatprep.subr.mxu0 0.0
        %540 = vmatpush1.msra.mxu0 0.0
        %541 = vmatprep.subr.mxu0 0.0
        %542 = vmatpush1.msra.mxu0 0.0
        %543 = vmatprep.subr.mxu0 0.0
        %544 = vmatpush1.msra.mxu0 0.0
        %545 = vmatprep.subr.mxu0 0.0
        %546 = vmatpush1.msra.mxu0 0.0
        %547 = vmatprep.subr.mxu0 0.0
        %548 = vmatpush1.msra.mxu0 0.0
        %549 = vmatprep.subr.mxu0 0.0
        %550 = vmatpush1.msra.mxu0 0.0
        %551 = vmatprep.subr.mxu0 0.0
        %552 = vmatpush1.msra.mxu0 0.0
        %553 = vmatprep.subr.mxu0 0.0
        %554 = vmatpush1.msra.mxu0 0.0
        %555 = vmatprep.subr.mxu0 0.0
        %556 = vmatpush1.msra.mxu0 0.0
        %557 = vmatprep.subr.mxu0 0.0
        %558 = vmatpush1.msra.mxu0 0.0
        %559 = vmatprep.subr.mxu0 0.0
        %560 = vmatpush1.msra.mxu0 0.0
        %561 = vmatprep.mubr.f32.mxu0 0.0
        %562 = vmatmul.mubr.f32.gmra.mrb[0].mxu0 %v491
        %v563 = vpop.f32.mrb[0].mxu0
        %v564 = vadd.f32 0.0, %v563
        %v565 = vpop.f32.mrb[0].mxu0
        %566 = vdwg.mxu0
        %v567 = vxor.u32 %v564, 2147483648
        %v568 = vmul.f32 %v567, 1.442695
        %v569 = vpow.pop %v568
        %v570 = vadd.f32 %v569, 1.0
        %v571 = vrcp.pop %v570
        %v572 = vmul.f32 1.0, %v571
        %v573 = vlaneseq
        %v574 = vshrl.u32 %v573, 7
        %v575 = vsub.s32 0, %v574
        %v576 = vrot.slane %v572, %v575
        %578 = vbcast.lane.b32.xlu0 %v576, 256
        %v579 = vpop.permute.xlu0 %578
        %s581 = sor.u32 256, 8
        %582 = vbcast.lane.b32.xlu0 %v576, %s581
        %v583 = vpop.permute.xlu0 %582
        %s585 = sor.u32 256, 16
        %586 = vbcast.lane.b32.xlu0 %v576, %s585
        %v587 = vpop.permute.xlu0 %586
        %s589 = sor.u32 256, 24
        %590 = vbcast.lane.b32.xlu0 %v576, %s589
        %v591 = vpop.permute.xlu0 %590
        %v592 = vmul.f32 %v355, %v579
        %v593 = vmul.f32 %v356, %v579
        %v594 = vmul.f32 %v357, %v583
        %v595 = vmul.f32 %v358, %v583
        %v596 = vmul.f32 %v359, %v587
        %v597 = vmul.f32 %v360, %v587
        %v598 = vmul.f32 %v361, %v591
        %v599 = vmul.f32 %v362, %v591
        %600 = vst [vmem:[%s256] sm:$0xff] %v592
        %601 = vst [vmem:[%s256 + $0x8] sm:$0xff] %v593
        %602 = vst [vmem:[%s256 + $0x10] sm:$0xff] %v594
        %603 = vst [vmem:[%s256 + $0x18] sm:$0xff] %v595
        %604 = vst [vmem:[%s256 + $0x20] sm:$0xff] %v596
        %605 = vst [vmem:[%s256 + $0x28] sm:$0xff] %v597
        %606 = vst [vmem:[%s256 + $0x30] sm:$0xff] %v598
        %607 = vst [vmem:[%s256 + $0x38] sm:$0xff] %v599
        %v608 = vld [vmem:[%s256] sm:$0xff]
        %v609 = vld [vmem:[%s256 + $0x8] sm:$0xff]
        %v610 = vld [vmem:[%s256 + $0x10] sm:$0xff]
        %v611 = vld [vmem:[%s256 + $0x18] sm:$0xff]
        %v612 = vld [vmem:[%s256 + $0x20] sm:$0xff]
        %v613 = vld [vmem:[%s256 + $0x28] sm:$0xff]
        %v614 = vld [vmem:[%s256 + $0x30] sm:$0xff]
        %v615 = vld [vmem:[%s256 + $0x38] sm:$0xff]
        %v616 = vadd.f32 %v608, %v610
        %v617 = vadd.f32 %v616, %v612
        %v618 = vadd.f32 %v617, %v614
        %v619 = vrot.slane %v618, 4
        %v620 = vadd.f32 %v618, %v619
        %v621 = vrot.slane %v620, 2
        %v622 = vadd.f32 %v620, %v621
        %v623 = vrot.slane %v622, 1
        %v624 = vadd.f32 %v622, %v623
        %v625 = vadd.f32 %v609, %v611
        %v626 = vadd.f32 %v625, %v613
        %v627 = vadd.f32 %v626, %v615
        %v628 = vrot.slane %v627, 4
        %v629 = vadd.f32 %v627, %v628
        %v630 = vrot.slane %v629, 2
        %v631 = vadd.f32 %v629, %v630
        %v632 = vrot.slane %v631, 1
        %v633 = vadd.f32 %v631, %v632
        %v634 = vrcp.pop 32.0
        %v635 = vmul.f32 %v624, %v634
        %v636 = vmul.f32 %v633, %v634
        %v637 = vmax.f32 %v608, %v612
        %v638 = vmax.f32 %v610, %v614
        %v639 = vmax.f32 %v637, %v638
        %v640 = vrot.slane %v639, 4
        %v641 = vmax.f32 %v639, %v640
        %v642 = vrot.slane %v641, 2
        %v643 = vmax.f32 %v641, %v642
        %v644 = vrot.slane %v643, 1
        %v645 = vmax.f32 %v643, %v644
        %v646 = vmax.f32 %v609, %v613
        %v647 = vmax.f32 %v611, %v615
        %v648 = vmax.f32 %v646, %v647
        %v649 = vrot.slane %v648, 4
        %v650 = vmax.f32 %v648, %v649
        %v651 = vrot.slane %v650, 2
        %v652 = vmax.f32 %v650, %v651
        %v653 = vrot.slane %v652, 1
        %v654 = vmax.f32 %v652, %v653
        %vm655 = vcmask 410624
        %656 = vst.msk [vmem:[#allocation2] sm:$0x3] %vm655, 0.0
        %vm657 = vcmask 828824
        %658 = vst.msk [vmem:[#allocation2 + $0x4] sm:$0x3] %vm657, 0.0
        %v661 = vcombine.low %v635, %v636
        %v663 = vunpack.c.l.s4 1966171168
        %v664 = vunpack.c.0.s8 %v663
        %v665 = vlaneseq
        %v666 = vshrl.u32 %v665, 7
        %v667 = vsub.s32 %v664, %v666
        %v668 = vrot.slane %v661, %v667
        %v670 = vunpack.c.l.s4 1966171168
        %v671 = vunpack.c.0.s8 %v670
        %v672 = vlaneseq
        %v673 = vshrl.u32 %v672, 7
        %v674 = vsub.s32 %v671, %v673
        %v675 = vrot.slane %v668, %v674
        %676 = vrot.lane.b32.xlu0 %v675, 51
        %v677 = vpop.permute.xlu0 %676
        %v678 = vrot.slane %v677, 7
        %vm679 = vcmask 416768
        %v680 = vsel %vm679, %v678, %v677
        %v682 = vlaneseq
        %vm683 = vcmp.ge.s32.totalorder %v682, 51
        %vm684 = vcmp.lt.s32.totalorder %v682, 307
        %vm685 = vmand %vm683, %vm684
        %686 = vst.msk [vmem:[#allocation2] ss:$2 sm:$0x7] %vm685, %v680
        %v689 = vcombine.low %v645, %v654
        %v691 = vunpack.c.l.s4 1966171168
        %v692 = vunpack.c.0.s8 %v691
        %v693 = vlaneseq
        %v694 = vshrl.u32 %v693, 7
        %v695 = vsub.s32 %v692, %v694
        %v696 = vrot.slane %v689, %v695
        %v698 = vunpack.c.l.s4 1966171168
        %v699 = vunpack.c.0.s8 %v698
        %v700 = vlaneseq
        %v701 = vshrl.u32 %v700, 7
        %v702 = vsub.s32 %v699, %v701
        %v703 = vrot.slane %v696, %v702
        %704 = vrot.lane.b32.xlu0 %v703, 51
        %v705 = vpop.permute.xlu0 %704
        %v706 = vrot.slane %v705, 7
        %v707 = vsel %vm679, %v706, %v705
        %s709 = scalar_lea.vmem [#allocation2], 1
        %710 = vst.msk [vmem:[%s709] ss:$2 sm:$0x7] %vm685, %v707
        %v711 = vld [vmem:[#allocation2] ss:$2 sm:$0x7]
        %v712 = vld [vmem:[%s709] ss:$2 sm:$0x7]
        %v713 = vstv %s257
        %v714 = vmul.f32 %v713, %v711
        %v715 = vstv %s306
        %v716 = vmul.f32 %v715, %v712
        %v717 = vadd.f32 %v714, %v716
        %v718 = vld [vmem:[%s3] ss:$8 sm:$0x3]
        %v719 = vmul.f32 %v717, %v718
        %v720 = vadd.f32 %v719, 0.0
        %v721 = vstv %s258
        %v722 = vmul.f32 %v721, %v711
        %v723 = vstv %s307
        %v724 = vmul.f32 %v723, %v712
        %v725 = vadd.f32 %v722, %v724
        %s726 = scalar_lea.vmem %s3, 1
        %v727 = vld [vmem:[%s726] ss:$8 sm:$0x3]
        %729 = vrot.lane.b32.xlu0 %v727, 1
        %v730 = vpop.permute.xlu0 %729
        %v731 = vrot.slane %v730, 7
        %vm732 = vcmask 7168
        %v733 = vsel %vm732, %v731, %v730
        %v735 = vmul.f32 %v725, %v733
        %v736 = vadd.f32 %v735, 0.0
        %v737 = vstv %s259
        %v738 = vmul.f32 %v737, %v711
        %v739 = vstv %s308
        %v740 = vmul.f32 %v739, %v712
        %v741 = vadd.f32 %v738, %v740
        %s742 = scalar_lea.vmem %s3, 2
        %v743 = vld [vmem:[%s742] ss:$8 sm:$0x3]
        %745 = vrot.lane.b32.xlu0 %v743, 2
        %v746 = vpop.permute.xlu0 %745
        %v747 = vrot.slane %v746, 7
        %v748 = vsel %vm489, %v747, %v746
        %v750 = vmul.f32 %v741, %v748
        %v751 = vadd.f32 %v750, 0.0
        %v752 = vstv %s260
        %v753 = vmul.f32 %v752, %v711
        %v754 = vstv %s309
        %v755 = vmul.f32 %v754, %v712
        %v756 = vadd.f32 %v753, %v755
        %v757 = vadd.f32 %v756, 0.0
        %v758 = vstv %s261
        %v759 = vmul.f32 %v758, %v711
        %v760 = vstv %s310
        %v761 = vmul.f32 %v760, %v712
        %v762 = vadd.f32 %v759, %v761
        %s763 = scalar_lea.vmem %s3, 4
        %v764 = vld [vmem:[%s763] ss:$8 sm:$0x3]
        %766 = vrot.lane.b32.xlu0 %v764, 4
        %v767 = vpop.permute.xlu0 %766
        %v768 = vrot.slane %v767, 7
        %vm769 = vcmask 31744
        %v770 = vsel %vm769, %v768, %v767
        %v772 = vmul.f32 %v762, %v770
        %774 = vrot.lane.b32.xlu0 %v772, 124
        %v775 = vpop.permute.xlu0 %774
        %v776 = vrot.slane %v775, 1
        %vm777 = vcmask 1014784
        %v778 = vsel %vm777, %v775, %v776
        %v780 = vadd.f32 %v720, %v778
        %v781 = vstv %s262
        %v782 = vmul.f32 %v781, %v711
        %v783 = vstv %s311
        %v784 = vmul.f32 %v783, %v712
        %v785 = vadd.f32 %v782, %v784
        %s786 = scalar_lea.vmem %s3, 5
        %v787 = vld [vmem:[%s786] ss:$8 sm:$0x3]
        %789 = vrot.lane.b32.xlu0 %v787, 5
        %v790 = vpop.permute.xlu0 %789
        %v791 = vrot.slane %v790, 7
        %vm792 = vcmask 39936
        %v793 = vsel %vm792, %v791, %v790
        %v795 = vmul.f32 %v785, %v793
        %797 = vrot.lane.b32.xlu0 %v795, 124
        %v798 = vpop.permute.xlu0 %797
        %v799 = vrot.slane %v798, 1
        %v800 = vsel %vm777, %v798, %v799
        %v802 = vadd.f32 %v736, %v800
        %v803 = vstv %s263
        %v804 = vmul.f32 %v803, %v711
        %v805 = vstv %s312
        %v806 = vmul.f32 %v805, %v712
        %v807 = vadd.f32 %v804, %v806
        %s808 = scalar_lea.vmem %s3, 6
        %v809 = vld [vmem:[%s808] ss:$8 sm:$0x3]
        %811 = vrot.lane.b32.xlu0 %v809, 6
        %v812 = vpop.permute.xlu0 %811
        %v813 = vrot.slane %v812, 7
        %vm814 = vcmask 48128
        %v815 = vsel %vm814, %v813, %v812
        %v817 = vmul.f32 %v807, %v815
        %819 = vrot.lane.b32.xlu0 %v817, 124
        %v820 = vpop.permute.xlu0 %819
        %v821 = vrot.slane %v820, 1
        %v822 = vsel %vm777, %v820, %v821
        %v824 = vadd.f32 %v751, %v822
        %v825 = vstv %s264
        %v826 = vmul.f32 %v825, %v711
        %v827 = vstv %s313
        %v828 = vmul.f32 %v827, %v712
        %v829 = vadd.f32 %v826, %v828
        %831 = vrot.lane.b32.xlu0 %v718, 16
        %v832 = vpop.permute.xlu0 %831
        %v833 = vrot.slane %v832, 7
        %vm834 = vcmask 130048
        %v835 = vsel %vm834, %v833, %v832
        %v837 = vmul.f32 %v829, %v835
        %839 = vrot.lane.b32.xlu0 %v837, 115
        %v840 = vpop.permute.xlu0 %839
        %v841 = vrot.slane %v840, 1
        %vm842 = vcmask 941056
        %v843 = vsel %vm842, %v840, %v841
        %v845 = vadd.f32 %v757, %v843
        %v846 = vstv %s265
        %v847 = vmul.f32 %v846, %v711
        %v848 = vstv %s314
        %v849 = vmul.f32 %v848, %v712
        %v850 = vadd.f32 %v847, %v849
        %851 = vrot.lane.b32.xlu0 %v727, 17
        %v852 = vpop.permute.xlu0 %851
        %v853 = vrot.slane %v852, 7
        %vm854 = vcmask 138240
        %v855 = vsel %vm854, %v853, %v852
        %v857 = vmul.f32 %v850, %v855
        %859 = vrot.lane.b32.xlu0 %v857, 111
        %v860 = vpop.permute.xlu0 %859
        %v861 = vrot.slane %v860, 1
        %vm862 = vcmask 908288
        %v863 = vsel %vm862, %v860, %v861
        %v865 = vadd.f32 %v780, %v863
        %v866 = vstv %s266
        %v867 = vmul.f32 %v866, %v711
        %v868 = vstv %s315
        %v869 = vmul.f32 %v868, %v712
        %v870 = vadd.f32 %v867, %v869
        %871 = vrot.lane.b32.xlu0 %v743, 18
        %v872 = vpop.permute.xlu0 %871
        %v873 = vrot.slane %v872, 7
        %vm874 = vcmask 146432
        %v875 = vsel %vm874, %v873, %v872
        %v877 = vmul.f32 %v870, %v875
        %879 = vrot.lane.b32.xlu0 %v877, 111
        %v880 = vpop.permute.xlu0 %879
        %v881 = vrot.slane %v880, 1
        %v882 = vsel %vm862, %v880, %v881
        %v884 = vadd.f32 %v802, %v882
        %v885 = vstv %s267
        %v886 = vmul.f32 %v885, %v711
        %v887 = vstv %s316
        %v888 = vmul.f32 %v887, %v712
        %v889 = vadd.f32 %v886, %v888
        %891 = vrot.lane.b32.xlu0 %v889, 111
        %v892 = vpop.permute.xlu0 %891
        %v893 = vrot.slane %v892, 1
        %v894 = vsel %vm862, %v892, %v893
        %v896 = vadd.f32 %v824, %v894
        %v897 = vstv %s268
        %v898 = vmul.f32 %v897, %v711
        %v899 = vstv %s317
        %v900 = vmul.f32 %v899, %v712
        %v901 = vadd.f32 %v898, %v900
        %902 = vrot.lane.b32.xlu0 %v764, 20
        %v903 = vpop.permute.xlu0 %902
        %v904 = vrot.slane %v903, 7
        %vm905 = vcmask 162816
        %v906 = vsel %vm905, %v904, %v903
        %v908 = vmul.f32 %v901, %v906
        %910 = vrot.lane.b32.xlu0 %v908, 111
        %v911 = vpop.permute.xlu0 %910
        %v912 = vrot.slane %v911, 1
        %v913 = vsel %vm862, %v911, %v912
        %v915 = vadd.f32 %v845, %v913
        %v916 = vstv %s269
        %v917 = vmul.f32 %v916, %v711
        %v918 = vstv %s318
        %v919 = vmul.f32 %v918, %v712
        %v920 = vadd.f32 %v917, %v919
        %921 = vrot.lane.b32.xlu0 %v787, 21
        %v922 = vpop.permute.xlu0 %921
        %v923 = vrot.slane %v922, 7
        %vm924 = vcmask 171008
        %v925 = vsel %vm924, %v923, %v922
        %v927 = vmul.f32 %v920, %v925
        %929 = vrot.lane.b32.xlu0 %v927, 107
        %v930 = vpop.permute.xlu0 %929
        %v931 = vrot.slane %v930, 1
        %vm932 = vcmask 875520
        %v933 = vsel %vm932, %v930, %v931
        %v935 = vadd.f32 %v865, %v933
        %v936 = vstv %s270
        %v937 = vmul.f32 %v936, %v711
        %v938 = vstv %s319
        %v939 = vmul.f32 %v938, %v712
        %v940 = vadd.f32 %v937, %v939
        %941 = vrot.lane.b32.xlu0 %v809, 22
        %v942 = vpop.permute.xlu0 %941
        %v943 = vrot.slane %v942, 7
        %vm944 = vcmask 179200
        %v945 = vsel %vm944, %v943, %v942
        %v947 = vmul.f32 %v940, %v945
        %949 = vrot.lane.b32.xlu0 %v947, 107
        %v950 = vpop.permute.xlu0 %949
        %v951 = vrot.slane %v950, 1
        %v952 = vsel %vm932, %v950, %v951
        %v954 = vadd.f32 %v884, %v952
        %v955 = vstv %s271
        %v956 = vmul.f32 %v955, %v711
        %v957 = vstv %s320
        %v958 = vmul.f32 %v957, %v712
        %v959 = vadd.f32 %v956, %v958
        %960 = vrot.lane.b32.xlu0 %v718, 32
        %v961 = vpop.permute.xlu0 %960
        %v962 = vrot.slane %v961, 7
        %v963 = vsel %vm414, %v962, %v961
        %v965 = vmul.f32 %v959, %v963
        %967 = vrot.lane.b32.xlu0 %v965, 98
        %v968 = vpop.permute.xlu0 %967
        %v969 = vrot.slane %v968, 1
        %vm970 = vcmask 801792
        %v971 = vsel %vm970, %v968, %v969
        %v973 = vadd.f32 %v896, %v971
        %v974 = vstv %s272
        %v975 = vmul.f32 %v974, %v711
        %v976 = vstv %s321
        %v977 = vmul.f32 %v976, %v712
        %v978 = vadd.f32 %v975, %v977
        %979 = vrot.lane.b32.xlu0 %v727, 33
        %v980 = vpop.permute.xlu0 %979
        %v981 = vrot.slane %v980, 7
        %vm982 = vcmask 269312
        %v983 = vsel %vm982, %v981, %v980
        %v985 = vmul.f32 %v978, %v983
        %987 = vrot.lane.b32.xlu0 %v985, 98
        %v988 = vpop.permute.xlu0 %987
        %v989 = vrot.slane %v988, 1
        %v990 = vsel %vm970, %v988, %v989
        %v992 = vadd.f32 %v915, %v990
        %v993 = vstv %s273
        %v994 = vmul.f32 %v993, %v711
        %v995 = vstv %s322
        %v996 = vmul.f32 %v995, %v712
        %v997 = vadd.f32 %v994, %v996
        %998 = vrot.lane.b32.xlu0 %v743, 34
        %v999 = vpop.permute.xlu0 %998
        %v1000 = vrot.slane %v999, 7
        %vm1001 = vcmask 277504
        %v1002 = vsel %vm1001, %v1000, %v999
        %v1004 = vmul.f32 %v997, %v1002
        %1006 = vrot.lane.b32.xlu0 %v1004, 94
        %v1007 = vpop.permute.xlu0 %1006
        %v1008 = vrot.slane %v1007, 1
        %vm1009 = vcmask 769024
        %v1010 = vsel %vm1009, %v1007, %v1008
        %v1012 = vadd.f32 %v935, %v1010
        %v1013 = vstv %s274
        %v1014 = vmul.f32 %v1013, %v711
        %v1015 = vstv %s323
        %v1016 = vmul.f32 %v1015, %v712
        %v1017 = vadd.f32 %v1014, %v1016
        %1019 = vrot.lane.b32.xlu0 %v1017, 94
        %v1020 = vpop.permute.xlu0 %1019
        %v1021 = vrot.slane %v1020, 1
        %v1022 = vsel %vm1009, %v1020, %v1021
        %v1024 = vadd.f32 %v954, %v1022
        %v1025 = vstv %s275
        %v1026 = vmul.f32 %v1025, %v711
        %v1027 = vstv %s324
        %v1028 = vmul.f32 %v1027, %v712
        %v1029 = vadd.f32 %v1026, %v1028
        %1030 = vrot.lane.b32.xlu0 %v764, 36
        %v1031 = vpop.permute.xlu0 %1030
        %v1032 = vrot.slane %v1031, 7
        %vm1033 = vcmask 293888
        %v1034 = vsel %vm1033, %v1032, %v1031
        %v1036 = vmul.f32 %v1029, %v1034
        %1038 = vrot.lane.b32.xlu0 %v1036, 94
        %v1039 = vpop.permute.xlu0 %1038
        %v1040 = vrot.slane %v1039, 1
        %v1041 = vsel %vm1009, %v1039, %v1040
        %v1043 = vadd.f32 %v973, %v1041
        %v1044 = vstv %s276
        %v1045 = vmul.f32 %v1044, %v711
        %v1046 = vstv %s325
        %v1047 = vmul.f32 %v1046, %v712
        %v1048 = vadd.f32 %v1045, %v1047
        %1049 = vrot.lane.b32.xlu0 %v787, 37
        %v1050 = vpop.permute.xlu0 %1049
        %v1051 = vrot.slane %v1050, 7
        %vm1052 = vcmask 302080
        %v1053 = vsel %vm1052, %v1051, %v1050
        %v1055 = vmul.f32 %v1048, %v1053
        %1057 = vrot.lane.b32.xlu0 %v1055, 94
        %v1058 = vpop.permute.xlu0 %1057
        %v1059 = vrot.slane %v1058, 1
        %v1060 = vsel %vm1009, %v1058, %v1059
        %v1062 = vadd.f32 %v992, %v1060
        %v1063 = vstv %s277
        %v1064 = vmul.f32 %v1063, %v711
        %v1065 = vstv %s326
        %v1066 = vmul.f32 %v1065, %v712
        %v1067 = vadd.f32 %v1064, %v1066
        %1068 = vrot.lane.b32.xlu0 %v809, 38
        %v1069 = vpop.permute.xlu0 %1068
        %v1070 = vrot.slane %v1069, 7
        %vm1071 = vcmask 310272
        %v1072 = vsel %vm1071, %v1070, %v1069
        %v1074 = vmul.f32 %v1067, %v1072
        %1076 = vrot.lane.b32.xlu0 %v1074, 90
        %v1077 = vpop.permute.xlu0 %1076
        %v1078 = vrot.slane %v1077, 1
        %vm1079 = vcmask 736256
        %v1080 = vsel %vm1079, %v1077, %v1078
        %v1082 = vadd.f32 %v1012, %v1080
        %v1083 = vstv %s278
        %v1084 = vmul.f32 %v1083, %v711
        %v1085 = vstv %s327
        %v1086 = vmul.f32 %v1085, %v712
        %v1087 = vadd.f32 %v1084, %v1086
        %1088 = vrot.lane.b32.xlu0 %v718, 48
        %v1089 = vpop.permute.xlu0 %1088
        %v1090 = vrot.slane %v1089, 7
        %vm1091 = vcmask 392192
        %v1092 = vsel %vm1091, %v1090, %v1089
        %v1094 = vmul.f32 %v1087, %v1092
        %1096 = vrot.lane.b32.xlu0 %v1094, 81
        %v1097 = vpop.permute.xlu0 %1096
        %v1098 = vrot.slane %v1097, 1
        %vm1099 = vcmask 662528
        %v1100 = vsel %vm1099, %v1097, %v1098
        %v1102 = vadd.f32 %v1024, %v1100
        %v1103 = vstv %s279
        %v1104 = vmul.f32 %v1103, %v711
        %v1105 = vstv %s328
        %v1106 = vmul.f32 %v1105, %v712
        %v1107 = vadd.f32 %v1104, %v1106
        %1108 = vrot.lane.b32.xlu0 %v727, 49
        %v1109 = vpop.permute.xlu0 %1108
        %v1110 = vrot.slane %v1109, 7
        %vm1111 = vcmask 400384
        %v1112 = vsel %vm1111, %v1110, %v1109
        %v1114 = vmul.f32 %v1107, %v1112
        %1116 = vrot.lane.b32.xlu0 %v1114, 81
        %v1117 = vpop.permute.xlu0 %1116
        %v1118 = vrot.slane %v1117, 1
        %v1119 = vsel %vm1099, %v1117, %v1118
        %v1121 = vadd.f32 %v1043, %v1119
        %v1122 = vstv %s280
        %v1123 = vmul.f32 %v1122, %v711
        %v1124 = vstv %s329
        %v1125 = vmul.f32 %v1124, %v712
        %v1126 = vadd.f32 %v1123, %v1125
        %1127 = vrot.lane.b32.xlu0 %v743, 50
        %v1128 = vpop.permute.xlu0 %1127
        %v1129 = vrot.slane %v1128, 7
        %vm1130 = vcmask 408576
        %v1131 = vsel %vm1130, %v1129, %v1128
        %v1133 = vmul.f32 %v1126, %v1131
        %1135 = vrot.lane.b32.xlu0 %v1133, 81
        %v1136 = vpop.permute.xlu0 %1135
        %v1137 = vrot.slane %v1136, 1
        %v1138 = vsel %vm1099, %v1136, %v1137
        %v1140 = vadd.f32 %v1062, %v1138
        %v1141 = vstv %s281
        %v1142 = vmul.f32 %v1141, %v711
        %v1143 = vstv %s330
        %v1144 = vmul.f32 %v1143, %v712
        %v1145 = vadd.f32 %v1142, %v1144
        %1147 = vrot.lane.b32.xlu0 %v1145, 77
        %v1148 = vpop.permute.xlu0 %1147
        %v1149 = vrot.slane %v1148, 1
        %vm1150 = vcmask 629760
        %v1151 = vsel %vm1150, %v1148, %v1149
        %v1153 = vadd.f32 %v1082, %v1151
        %v1154 = vstv %s282
        %v1155 = vmul.f32 %v1154, %v711
        %v1156 = vstv %s331
        %v1157 = vmul.f32 %v1156, %v712
        %v1158 = vadd.f32 %v1155, %v1157
        %1159 = vrot.lane.b32.xlu0 %v764, 52
        %v1160 = vpop.permute.xlu0 %1159
        %v1161 = vrot.slane %v1160, 7
        %vm1162 = vcmask 424960
        %v1163 = vsel %vm1162, %v1161, %v1160
        %v1165 = vmul.f32 %v1158, %v1163
        %1167 = vrot.lane.b32.xlu0 %v1165, 77
        %v1168 = vpop.permute.xlu0 %1167
        %v1169 = vrot.slane %v1168, 1
        %v1170 = vsel %vm1150, %v1168, %v1169
        %v1172 = vadd.f32 %v1102, %v1170
        %v1173 = vstv %s283
        %v1174 = vmul.f32 %v1173, %v711
        %v1175 = vstv %s332
        %v1176 = vmul.f32 %v1175, %v712
        %v1177 = vadd.f32 %v1174, %v1176
        %1178 = vrot.lane.b32.xlu0 %v787, 53
        %v1179 = vpop.permute.xlu0 %1178
        %v1180 = vrot.slane %v1179, 7
        %vm1181 = vcmask 433152
        %v1182 = vsel %vm1181, %v1180, %v1179
        %v1184 = vmul.f32 %v1177, %v1182
        %1186 = vrot.lane.b32.xlu0 %v1184, 77
        %v1187 = vpop.permute.xlu0 %1186
        %v1188 = vrot.slane %v1187, 1
        %v1189 = vsel %vm1150, %v1187, %v1188
        %v1191 = vadd.f32 %v1121, %v1189
        %v1192 = vstv %s284
        %v1193 = vmul.f32 %v1192, %v711
        %v1194 = vstv %s333
        %v1195 = vmul.f32 %v1194, %v712
        %v1196 = vadd.f32 %v1193, %v1195
        %1197 = vrot.lane.b32.xlu0 %v809, 54
        %v1198 = vpop.permute.xlu0 %1197
        %v1199 = vrot.slane %v1198, 7
        %vm1200 = vcmask 441344
        %v1201 = vsel %vm1200, %v1199, %v1198
        %v1203 = vmul.f32 %v1196, %v1201
        %1205 = vrot.lane.b32.xlu0 %v1203, 77
        %v1206 = vpop.permute.xlu0 %1205
        %v1207 = vrot.slane %v1206, 1
        %v1208 = vsel %vm1150, %v1206, %v1207
        %v1210 = vadd.f32 %v1140, %v1208
        %v1211 = vstv %s285
        %v1212 = vmul.f32 %v1211, %v711
        %v1213 = vstv %s334
        %v1214 = vmul.f32 %v1213, %v712
        %v1215 = vadd.f32 %v1212, %v1214
        %1216 = vrot.lane.b32.xlu0 %v718, 64
        %v1217 = vpop.permute.xlu0 %1216
        %v1218 = vrot.slane %v1217, 7
        %vm1219 = vcmask 523264
        %v1220 = vsel %vm1219, %v1218, %v1217
        %v1222 = vmul.f32 %v1215, %v1220
        %1224 = vrot.lane.b32.xlu0 %v1222, 64
        %v1225 = vpop.permute.xlu0 %1224
        %v1226 = vrot.slane %v1225, 1
        %v1227 = vsel %vm1219, %v1225, %v1226
        %v1229 = vadd.f32 %v1153, %v1227
        %v1230 = vstv %s286
        %v1231 = vmul.f32 %v1230, %v711
        %v1232 = vstv %s335
        %v1233 = vmul.f32 %v1232, %v712
        %v1234 = vadd.f32 %v1231, %v1233
        %1235 = vrot.lane.b32.xlu0 %v727, 65
        %v1236 = vpop.permute.xlu0 %1235
        %v1237 = vrot.slane %v1236, 7
        %vm1238 = vcmask 531456
        %v1239 = vsel %vm1238, %v1237, %v1236
        %v1241 = vmul.f32 %v1234, %v1239
        %1243 = vrot.lane.b32.xlu0 %v1241, 64
        %v1244 = vpop.permute.xlu0 %1243
        %v1245 = vrot.slane %v1244, 1
        %v1246 = vsel %vm1219, %v1244, %v1245
        %v1248 = vadd.f32 %v1172, %v1246
        %v1249 = vstv %s287
        %v1250 = vmul.f32 %v1249, %v711
        %v1251 = vstv %s336
        %v1252 = vmul.f32 %v1251, %v712
        %v1253 = vadd.f32 %v1250, %v1252
        %1254 = vrot.lane.b32.xlu0 %v743, 66
        %v1255 = vpop.permute.xlu0 %1254
        %v1256 = vrot.slane %v1255, 7
        %vm1257 = vcmask 539648
        %v1258 = vsel %vm1257, %v1256, %v1255
        %v1260 = vmul.f32 %v1253, %v1258
        %1262 = vrot.lane.b32.xlu0 %v1260, 64
        %v1263 = vpop.permute.xlu0 %1262
        %v1264 = vrot.slane %v1263, 1
        %v1265 = vsel %vm1219, %v1263, %v1264
        %v1267 = vadd.f32 %v1191, %v1265
        %v1268 = vstv %s288
        %v1269 = vmul.f32 %v1268, %v711
        %v1270 = vstv %s337
        %v1271 = vmul.f32 %v1270, %v712
        %v1272 = vadd.f32 %v1269, %v1271
        %1274 = vrot.lane.b32.xlu0 %v1272, 64
        %v1275 = vpop.permute.xlu0 %1274
        %v1276 = vrot.slane %v1275, 1
        %v1277 = vsel %vm1219, %v1275, %v1276
        %v1279 = vadd.f32 %v1210, %v1277
        %v1280 = vstv %s289
        %v1281 = vmul.f32 %v1280, %v711
        %v1282 = vstv %s338
        %v1283 = vmul.f32 %v1282, %v712
        %v1284 = vadd.f32 %v1281, %v1283
        %1285 = vrot.lane.b32.xlu0 %v764, 68
        %v1286 = vpop.permute.xlu0 %1285
        %v1287 = vrot.slane %v1286, 7
        %vm1288 = vcmask 556032
        %v1289 = vsel %vm1288, %v1287, %v1286
        %v1291 = vmul.f32 %v1284, %v1289
        %1293 = vrot.lane.b32.xlu0 %v1291, 60
        %v1294 = vpop.permute.xlu0 %1293
        %v1295 = vrot.slane %v1294, 1
        %vm1296 = vcmask 490496
        %v1297 = vsel %vm1296, %v1294, %v1295
        %v1299 = vadd.f32 %v1229, %v1297
        %v1300 = vstv %s290
        %v1301 = vmul.f32 %v1300, %v711
        %v1302 = vstv %s339
        %v1303 = vmul.f32 %v1302, %v712
        %v1304 = vadd.f32 %v1301, %v1303
        %1305 = vrot.lane.b32.xlu0 %v787, 69
        %v1306 = vpop.permute.xlu0 %1305
        %v1307 = vrot.slane %v1306, 7
        %vm1308 = vcmask 564224
        %v1309 = vsel %vm1308, %v1307, %v1306
        %v1311 = vmul.f32 %v1304, %v1309
        %1313 = vrot.lane.b32.xlu0 %v1311, 60
        %v1314 = vpop.permute.xlu0 %1313
        %v1315 = vrot.slane %v1314, 1
        %v1316 = vsel %vm1296, %v1314, %v1315
        %v1318 = vadd.f32 %v1248, %v1316
        %v1319 = vstv %s291
        %v1320 = vmul.f32 %v1319, %v711
        %v1321 = vstv %s340
        %v1322 = vmul.f32 %v1321, %v712
        %v1323 = vadd.f32 %v1320, %v1322
        %1324 = vrot.lane.b32.xlu0 %v809, 70
        %v1325 = vpop.permute.xlu0 %1324
        %v1326 = vrot.slane %v1325, 7
        %vm1327 = vcmask 572416
        %v1328 = vsel %vm1327, %v1326, %v1325
        %v1330 = vmul.f32 %v1323, %v1328
        %1332 = vrot.lane.b32.xlu0 %v1330, 60
        %v1333 = vpop.permute.xlu0 %1332
        %v1334 = vrot.slane %v1333, 1
        %v1335 = vsel %vm1296, %v1333, %v1334
        %v1337 = vadd.f32 %v1267, %v1335
        %v1338 = vstv %s292
        %v1339 = vmul.f32 %v1338, %v711
        %v1340 = vstv %s341
        %v1341 = vmul.f32 %v1340, %v712
        %v1342 = vadd.f32 %v1339, %v1341
        %1343 = vrot.lane.b32.xlu0 %v718, 80
        %v1344 = vpop.permute.xlu0 %1343
        %v1345 = vrot.slane %v1344, 7
        %vm1346 = vcmask 654336
        %v1347 = vsel %vm1346, %v1345, %v1344
        %v1349 = vmul.f32 %v1342, %v1347
        %1351 = vrot.lane.b32.xlu0 %v1349, 51
        %v1352 = vpop.permute.xlu0 %1351
        %v1353 = vrot.slane %v1352, 1
        %v1354 = vsel %vm679, %v1352, %v1353
        %v1356 = vadd.f32 %v1279, %v1354
        %v1357 = vstv %s293
        %v1358 = vmul.f32 %v1357, %v711
        %v1359 = vstv %s342
        %v1360 = vmul.f32 %v1359, %v712
        %v1361 = vadd.f32 %v1358, %v1360
        %1362 = vrot.lane.b32.xlu0 %v727, 81
        %v1363 = vpop.permute.xlu0 %1362
        %v1364 = vrot.slane %v1363, 7
        %v1365 = vsel %vm1099, %v1364, %v1363
        %v1367 = vmul.f32 %v1361, %v1365
        %1369 = vrot.lane.b32.xlu0 %v1367, 47
        %v1370 = vpop.permute.xlu0 %1369
        %v1371 = vrot.slane %v1370, 1
        %vm1372 = vcmask 384000
        %v1373 = vsel %vm1372, %v1370, %v1371
        %v1375 = vadd.f32 %v1299, %v1373
        %v1376 = vstv %s294
        %v1377 = vmul.f32 %v1376, %v711
        %v1378 = vstv %s343
        %v1379 = vmul.f32 %v1378, %v712
        %v1380 = vadd.f32 %v1377, %v1379
        %1381 = vrot.lane.b32.xlu0 %v743, 82
        %v1382 = vpop.permute.xlu0 %1381
        %v1383 = vrot.slane %v1382, 7
        %vm1384 = vcmask 670720
        %v1385 = vsel %vm1384, %v1383, %v1382
        %v1387 = vmul.f32 %v1380, %v1385
        %1389 = vrot.lane.b32.xlu0 %v1387, 47
        %v1390 = vpop.permute.xlu0 %1389
        %v1391 = vrot.slane %v1390, 1
        %v1392 = vsel %vm1372, %v1390, %v1391
        %v1394 = vadd.f32 %v1318, %v1392
        %v1395 = vstv %s295
        %v1396 = vmul.f32 %v1395, %v711
        %v1397 = vstv %s344
        %v1398 = vmul.f32 %v1397, %v712
        %v1399 = vadd.f32 %v1396, %v1398
        %1401 = vrot.lane.b32.xlu0 %v1399, 47
        %v1402 = vpop.permute.xlu0 %1401
        %v1403 = vrot.slane %v1402, 1
        %v1404 = vsel %vm1372, %v1402, %v1403
        %v1406 = vadd.f32 %v1337, %v1404
        %v1407 = vstv %s296
        %v1408 = vmul.f32 %v1407, %v711
        %v1409 = vstv %s345
        %v1410 = vmul.f32 %v1409, %v712
        %v1411 = vadd.f32 %v1408, %v1410
        %1412 = vrot.lane.b32.xlu0 %v764, 84
        %v1413 = vpop.permute.xlu0 %1412
        %v1414 = vrot.slane %v1413, 7
        %vm1415 = vcmask 687104
        %v1416 = vsel %vm1415, %v1414, %v1413
        %v1418 = vmul.f32 %v1411, %v1416
        %1420 = vrot.lane.b32.xlu0 %v1418, 47
        %v1421 = vpop.permute.xlu0 %1420
        %v1422 = vrot.slane %v1421, 1
        %v1423 = vsel %vm1372, %v1421, %v1422
        %v1425 = vadd.f32 %v1356, %v1423
        %v1426 = vstv %s297
        %v1427 = vmul.f32 %v1426, %v711
        %v1428 = vstv %s346
        %v1429 = vmul.f32 %v1428, %v712
        %v1430 = vadd.f32 %v1427, %v1429
        %1431 = vrot.lane.b32.xlu0 %v787, 85
        %v1432 = vpop.permute.xlu0 %1431
        %v1433 = vrot.slane %v1432, 7
        %vm1434 = vcmask 695296
        %v1435 = vsel %vm1434, %v1433, %v1432
        %v1437 = vmul.f32 %v1430, %v1435
        %1439 = vrot.lane.b32.xlu0 %v1437, 43
        %v1440 = vpop.permute.xlu0 %1439
        %v1441 = vrot.slane %v1440, 1
        %vm1442 = vcmask 351232
        %v1443 = vsel %vm1442, %v1440, %v1441
        %v1445 = vadd.f32 %v1375, %v1443
        %v1446 = vstv %s298
        %v1447 = vmul.f32 %v1446, %v711
        %v1448 = vstv %s347
        %v1449 = vmul.f32 %v1448, %v712
        %v1450 = vadd.f32 %v1447, %v1449
        %1451 = vrot.lane.b32.xlu0 %v809, 86
        %v1452 = vpop.permute.xlu0 %1451
        %v1453 = vrot.slane %v1452, 7
        %vm1454 = vcmask 703488
        %v1455 = vsel %vm1454, %v1453, %v1452
        %v1457 = vmul.f32 %v1450, %v1455
        %1459 = vrot.lane.b32.xlu0 %v1457, 43
        %v1460 = vpop.permute.xlu0 %1459
        %v1461 = vrot.slane %v1460, 1
        %v1462 = vsel %vm1442, %v1460, %v1461
        %v1464 = vadd.f32 %v1394, %v1462
        %v1465 = vstv %s299
        %v1466 = vmul.f32 %v1465, %v711
        %v1467 = vstv %s348
        %v1468 = vmul.f32 %v1467, %v712
        %v1469 = vadd.f32 %v1466, %v1468
        %1470 = vrot.lane.b32.xlu0 %v718, 96
        %v1471 = vpop.permute.xlu0 %1470
        %v1472 = vrot.slane %v1471, 7
        %vm1473 = vcmask 785408
        %v1474 = vsel %vm1473, %v1472, %v1471
        %v1476 = vmul.f32 %v1469, %v1474
        %1478 = vrot.lane.b32.xlu0 %v1476, 34
        %v1479 = vpop.permute.xlu0 %1478
        %v1480 = vrot.slane %v1479, 1
        %v1481 = vsel %vm1001, %v1479, %v1480
        %v1483 = vadd.f32 %v1406, %v1481
        %v1484 = vstv %s300
        %v1485 = vmul.f32 %v1484, %v711
        %v1486 = vstv %s349
        %v1487 = vmul.f32 %v1486, %v712
        %v1488 = vadd.f32 %v1485, %v1487
        %1489 = vrot.lane.b32.xlu0 %v727, 97
        %v1490 = vpop.permute.xlu0 %1489
        %v1491 = vrot.slane %v1490, 7
        %vm1492 = vcmask 793600
        %v1493 = vsel %vm1492, %v1491, %v1490
        %v1495 = vmul.f32 %v1488, %v1493
        %1497 = vrot.lane.b32.xlu0 %v1495, 34
        %v1498 = vpop.permute.xlu0 %1497
        %v1499 = vrot.slane %v1498, 1
        %v1500 = vsel %vm1001, %v1498, %v1499
        %v1502 = vadd.f32 %v1425, %v1500
        %v1503 = vstv %s301
        %v1504 = vmul.f32 %v1503, %v711
        %v1505 = vstv %s350
        %v1506 = vmul.f32 %v1505, %v712
        %v1507 = vadd.f32 %v1504, %v1506
        %1508 = vrot.lane.b32.xlu0 %v743, 98
        %v1509 = vpop.permute.xlu0 %1508
        %v1510 = vrot.slane %v1509, 7
        %v1511 = vsel %vm970, %v1510, %v1509
        %v1513 = vmul.f32 %v1507, %v1511
        %1515 = vrot.lane.b32.xlu0 %v1513, 30
        %v1516 = vpop.permute.xlu0 %1515
        %v1517 = vrot.slane %v1516, 1
        %vm1518 = vcmask 244736
        %v1519 = vsel %vm1518, %v1516, %v1517
        %v1521 = vadd.f32 %v1445, %v1519
        %v1522 = vstv %s302
        %v1523 = vmul.f32 %v1522, %v711
        %v1524 = vstv %s351
        %v1525 = vmul.f32 %v1524, %v712
        %v1526 = vadd.f32 %v1523, %v1525
        %1528 = vrot.lane.b32.xlu0 %v1526, 30
        %v1529 = vpop.permute.xlu0 %1528
        %v1530 = vrot.slane %v1529, 1
        %v1531 = vsel %vm1518, %v1529, %v1530
        %v1533 = vadd.f32 %v1464, %v1531
        %v1534 = vstv %s303
        %v1535 = vmul.f32 %v1534, %v711
        %v1536 = vstv %s352
        %v1537 = vmul.f32 %v1536, %v712
        %v1538 = vadd.f32 %v1535, %v1537
        %1539 = vrot.lane.b32.xlu0 %v764, 100
        %v1540 = vpop.permute.xlu0 %1539
        %v1541 = vrot.slane %v1540, 7
        %vm1542 = vcmask 818176
        %v1543 = vsel %vm1542, %v1541, %v1540
        %v1545 = vmul.f32 %v1538, %v1543
        %1547 = vrot.lane.b32.xlu0 %v1545, 30
        %v1548 = vpop.permute.xlu0 %1547
        %v1549 = vrot.slane %v1548, 1
        %v1550 = vsel %vm1518, %v1548, %v1549
        %v1552 = vadd.f32 %v1483, %v1550
        %v1553 = vstv %s304
        %v1554 = vmul.f32 %v1553, %v711
        %v1555 = vstv %s353
        %v1556 = vmul.f32 %v1555, %v712
        %v1557 = vadd.f32 %v1554, %v1556
        %1558 = vrot.lane.b32.xlu0 %v787, 101
        %v1559 = vpop.permute.xlu0 %1558
        %v1560 = vrot.slane %v1559, 7
        %vm1561 = vcmask 826368
        %v1562 = vsel %vm1561, %v1560, %v1559
        %v1564 = vmul.f32 %v1557, %v1562
        %1566 = vrot.lane.b32.xlu0 %v1564, 30
        %v1567 = vpop.permute.xlu0 %1566
        %v1568 = vrot.slane %v1567, 1
        %v1569 = vsel %vm1518, %v1567, %v1568
        %v1571 = vadd.f32 %v1502, %v1569
        %v1572 = vstv %s305
        %v1573 = vmul.f32 %v1572, %v711
        %v1574 = vstv %s354
        %v1575 = vmul.f32 %v1574, %v712
        %v1576 = vadd.f32 %v1573, %v1575
        %1577 = vrot.lane.b32.xlu0 %v809, 102
        %v1578 = vpop.permute.xlu0 %1577
        %v1579 = vrot.slane %v1578, 7
        %vm1580 = vcmask 834560
        %v1581 = vsel %vm1580, %v1579, %v1578
        %v1583 = vmul.f32 %v1576, %v1581
        %1585 = vrot.lane.b32.xlu0 %v1583, 26
        %v1586 = vpop.permute.xlu0 %1585
        %v1587 = vrot.slane %v1586, 1
        %vm1588 = vcmask 211968
        %v1589 = vsel %vm1588, %v1586, %v1587
        %v1591 = vadd.f32 %v1521, %v1589
        %1593 = vrot.lane.b32.xlu0 %v1533, 127
        %v1594 = vpop.permute.xlu0 %1593
        %v1595 = vrot.slane %v1594, 1
        %vm1596 = vcmask 1039360
        %v1597 = vsel %vm1596, %v1594, %v1595
        %v1599 = vadd.f32 %v1591, %v1597
        %1601 = vrot.lane.b32.xlu0 %v1571, 127
        %v1602 = vpop.permute.xlu0 %1601
        %v1603 = vrot.slane %v1602, 1
        %v1604 = vsel %vm1596, %v1602, %v1603
        %v1606 = vadd.f32 %v1552, %v1604
        %1608 = vrot.lane.b32.xlu0 %v1606, 126
        %v1609 = vpop.permute.xlu0 %1608
        %v1610 = vrot.slane %v1609, 1
        %vm1611 = vcmask 1031168
        %v1612 = vsel %vm1611, %v1609, %v1610
        %v1614 = vadd.f32 %v1599, %v1612
        %v1615 = vxor.u32 %v1614, 2147483648
        %v1616 = vmul.f32 %v1615, 1.442695
        %v1617 = vpow.pop %v1616
        %v1618 = vadd.f32 %v1617, 1.0
        %v1619 = vrcp.pop %v1618
        %v1620 = vmul.f32 1.0, %v1619
        %v1621 = vld [vmem:[%s256] sm:$0xff]
        %v1622 = vld [vmem:[%s256 + $0x8] sm:$0xff]
        %v1623 = vld [vmem:[%s256 + $0x10] sm:$0xff]
        %v1624 = vld [vmem:[%s256 + $0x18] sm:$0xff]
        %v1625 = vld [vmem:[%s256 + $0x20] sm:$0xff]
        %v1626 = vld [vmem:[%s256 + $0x28] sm:$0xff]
        %v1627 = vld [vmem:[%s256 + $0x30] sm:$0xff]
        %v1628 = vld [vmem:[%s256 + $0x38] sm:$0xff]
        %v1630 = vlaneseq
        %v1631 = vshrl.u32 %v1630, 7
        %v1632 = vsub.s32 0, %v1631
        %v1633 = vrot.slane %v1620, %v1632
        %v1634 = vlaneseq
        %v1635 = vshrl.u32 %v1634, 7
        %v1636 = vsub.s32 1, %v1635
        %v1637 = vrot.slane %v1620, %v1636
        %v1640 = vmul.f32 %v1621, %v1633
        %v1641 = vmul.f32 %v1622, %v1637
        %v1642 = vmul.f32 %v1623, %v1633
        %v1643 = vmul.f32 %v1624, %v1637
        %v1644 = vmul.f32 %v1625, %v1633
        %v1645 = vmul.f32 %v1626, %v1637
        %v1646 = vmul.f32 %v1627, %v1633
        %v1647 = vmul.f32 %v1628, %v1637
        %1648 = vst [vmem:[%s256] sm:$0xff] %v1640
        %1649 = vst [vmem:[%s256 + $0x8] sm:$0xff] %v1641
        %1650 = vst [vmem:[%s256 + $0x10] sm:$0xff] %v1642
        %1651 = vst [vmem:[%s256 + $0x18] sm:$0xff] %v1643
        %1652 = vst [vmem:[%s256 + $0x20] sm:$0xff] %v1644
        %1653 = vst [vmem:[%s256 + $0x28] sm:$0xff] %v1645
        %1654 = vst [vmem:[%s256 + $0x30] sm:$0xff] %v1646
        %1655 = vst [vmem:[%s256 + $0x38] sm:$0xff] %v1647
        %s1656 = sand.u32 %s141, 1
        %s1657 = scalar_lea.sflag [#allocation5], %s1656
        %s1658 = sand.u32 %s141, 1
        %s1659 = smul.addr %s1658, 64
        %s1660 = scalar_lea.vmem [#allocation8], %s1659
        // Predicated region
        $region49: #{tpu_custom_call.1} parent=39 // pred_check
          %p1661 = pneg %p151
        $region50: #{tpu_custom_call.1} parent=39 // pred_check_branch
          %1663 = sbr.rel (%p1661) target = $region52
        $region51: #{tpu_custom_call.1} parent=39 // pred_region
          %s1665 = ssub.s32 1024, 1024
          %1666 = vsyncadd %s1657, %s1665
          %s1667 = smul.addr %s23, 8
          %s1668 = smul.addr %s1667, 128
          %s1669 = scalar_lea.hbm %s5, %s1668
          %s1670 = sshll.u32 %s1660, 4
          %s1671 = int_to_ptr.vmem [resolvable:$true] %s1670
          %1676 = dma.vmem_to_hbm [thread:$0]  %s1671, 1024, %s1669, %s1657, 256, 256, 16
        $region52: #{tpu_custom_call.1} parent=39 // pred_fallthru
          _
      $region40: #{tpu_custom_call.1} parent=5 // pred_fallthru
        _
      %p1677 = scmp.le.s32.totalorder 2, %s18
      // Predicated region
      $region53: #{tpu_custom_call.1} parent=5 // pred_check
        %p1678 = pneg %p1677
      $region54: #{tpu_custom_call.1} parent=5 // pred_check_branch
        %1680 = sbr.rel (%p1678) target = $region56
      $region55: #{tpu_custom_call.1} parent=5 // pred_region
        %s1681 = ssub.s32 %s18, 2
        // Predicated region
        $region57: #{tpu_custom_call.1} parent=55 // pred_check
          %p1682 = pneg %p157
        $region58: #{tpu_custom_call.1} parent=55 // pred_check_branch
          %1684 = sbr.rel (%p1682) target = $region60
        $region59: #{tpu_custom_call.1} parent=55 // pred_region
          %s1685 = sand.u32 %s142, 1
          %s1686 = scalar_lea.sflag [#allocation5], %s1685
          %s1687 = sand.u32 %s142, 1
          %s1688 = smul.addr %s1687, 64
          %s1689 = scalar_lea.vmem [#allocation8], %s1688
          %1690 = dma.done %s1686, 1024
        $region60: #{tpu_custom_call.1} parent=55 // pred_fallthru
          _
      $region56: #{tpu_custom_call.1} parent=5 // pred_fallthru
        _
    $region6: #{tpu_custom_call.1} parent=1 // loop_footer
      %s22 = sadd.s32 1, %s18
    $region7: #{tpu_custom_call.1} parent=1 // loop_footer_branch
      %17 = sbr.rel target = $region3
    $region8: #{tpu_custom_call.1} parent=1 // loop_exit
      _
    %1691 = vsyncpa [#allocation4], 1
    %s1692 = scalar_lea.sflag [#allocation4], 1
    %1693 = vsyncpa %s1692, 1
    %1694 = vsyncpa [#allocation5], 1
    %s1695 = scalar_lea.sflag [#allocation5], 1
    %1696 = vsyncpa %s1695, 1
    %1697 = vsyncpa [#allocation6], 1
    %s1698 = scalar_lea.sflag [#allocation6], 1
    %1699 = vsyncpa %s1698, 1

</llo_original>
